<compile_context>
chip_gen: v7x
topology: tpu7x:2x2x1
jax: 0.10.0
libtpu: 0.0.40
codegen_flags: <defaults>
</compile_context>

<pallas_src>
import jax
import jax.numpy as jnp
from jax.experimental import pallas as pl
from jax.experimental.pallas import tpu as pltpu

INPUT_DIM = 25
INPUT_PAD = 32     # x lane-padded host-side
HIDDEN_DIM = 200
OUTPUT_DIM = 1

HIDDEN_PAD = 256   # hidden padded to full MXU / lane width
Y_LANE = 253       # y_pred lane in the output slab
C_LANE = 254       # control_out lane
T_LANE = 255       # treatment_out lane
BATCH_TILE = 512   # batch tile for the grid


def _elu(v):
    # ELU(alpha=1), f32.  Keep the where-select form: exp(v) on the untaken
    # (positive) branch is discarded per-lane, so no clamp is needed and no
    # inf*0 NaN can be injected.
    return jnp.where(v > 0.0, v, jnp.exp(v) - 1.0)


def tarnet_kernel(
    x_ref, t_ref,
    rw1, rb1, rw2, rb2, rw3, rb3,       # representation layers (bf16 W, f32 b)
    aw1, ab1,                           # fused arm layer 1: (HP, 2*HP)
    cw2, cb2, tw2, tb2,                 # per-arm layer 2 (padded)
    chw, thw, hb,                       # fused heads -> lanes C_LANE / T_LANE
    out_ref,
):
    def linear(h, w_ref, b_ref):
        # bf16 MXU inputs, f32 accumulation, f32 bias-add.
        return (jnp.dot(h.astype(jnp.bfloat16), w_ref[...],
                        preferred_element_type=jnp.float32) + b_ref[...])

    x = x_ref[...]

    # representation_layers: 3 x (Linear -> ELU); padded lanes 200..255 stay
    # exactly 0 (zero weight columns, zero bias, ELU(0) == 0).
    h = _elu(linear(x, rw1, rb1))
    h = _elu(linear(h, rw2, rb2))
    rep = _elu(linear(h, rw3, rb3))

    # Both arms' first layers fused into one (HP, 2*HP) matmul; control half
    # lives in lanes [:HP], treatment half in lanes [HP:].
    a1 = _elu(linear(rep, aw1, ab1))
    hc = _elu(linear(a1[:, :HIDDEN_PAD], cw2, cb2))
    ht = _elu(linear(a1[:, HIDDEN_PAD:], tw2, tb2))

    # Fused heads, already lane-routed host-side: lane C_LANE = control_out,
    # lane T_LANE = treatment_out, every other lane exactly 0.
    heads = (jnp.dot(hc.astype(jnp.bfloat16), chw[...],
                     preferred_element_type=jnp.float32)
             + jnp.dot(ht.astype(jnp.bfloat16), thw[...],
                       preferred_element_type=jnp.float32)
             + hb[...])

    cout = heads[:, C_LANE:C_LANE + 1]
    tout = heads[:, T_LANE:T_LANE + 1]
    t = t_ref[...]
    y = t * tout + (1.0 - t) * cout

    # Single lane-dense output slab: rep in lanes [0, 200), heads already sit
    # on lanes 254/255 (rep is 0 there), y goes to lane 253 via one select.
    slab = rep + heads
    lane = jax.lax.broadcasted_iota(jnp.int32, slab.shape, 1)
    out_ref[...] = jnp.where(lane == Y_LANE, y, slab)


def _pad_to(a, shape, dtype=jnp.float32):
    out = jnp.zeros(shape, jnp.float32)
    out = out.at[tuple(slice(0, s) for s in a.shape)].set(a)
    return out.astype(dtype)


def _pack_kernel_params(params):
    """Pad / fuse / bf16-cast the PyTorch-shaped params into kernel operands."""
    H, HP = HIDDEN_DIM, HIDDEN_PAD
    bf16 = jnp.bfloat16
    (rw1, rb1), (rw2, rb2), (rw3, rb3) = params["rep"]
    (cw1, cb1), (cw2, cb2), (cw3, cb3) = params["control"]
    (tw1, tb1), (tw2, tb2), (tw3, tb3) = params["treatment"]

    rep_p = [
        _pad_to(rw1, (INPUT_PAD, HP), bf16), _pad_to(rb1, (1, HP)),
        _pad_to(rw2, (HP, HP), bf16), _pad_to(rb2, (1, HP)),
        _pad_to(rw3, (HP, HP), bf16), _pad_to(rb3, (1, HP)),
    ]

    # Fused first arm layer: [ control | treatment ] along the output lanes.
    aw1 = jnp.zeros((HP, 2 * HP), jnp.float32)
    aw1 = aw1.at[:H, :H].set(cw1).at[:H, HP:HP + H].set(tw1).astype(bf16)
    ab1 = jnp.zeros((1, 2 * HP), jnp.float32)
    ab1 = ab1.at[:, :H].set(cb1).at[:, HP:HP + H].set(tb1)

    cw2_p, cb2_p = _pad_to(cw2, (HP, HP), bf16), _pad_to(cb2, (1, HP))
    tw2_p, tb2_p = _pad_to(tw2, (HP, HP), bf16), _pad_to(tb2, (1, HP))

    # Fused heads routed straight to their output lanes (host-side, free):
    # control head -> lane C_LANE, treatment head -> lane T_LANE.
    chw = (jnp.zeros((HP, HP), jnp.float32)
           .at[:H, C_LANE].set(cw3[:, 0]).astype(bf16))
    thw = (jnp.zeros((HP, HP), jnp.float32)
           .at[:H, T_LANE].set(tw3[:, 0]).astype(bf16))
    hb = (jnp.zeros((1, HP), jnp.float32)
          .at[0, C_LANE].set(cb3[0, 0]).at[0, T_LANE].set(tb3[0, 0]))

    return rep_p + [aw1, ab1, cw2_p, cb2_p, tw2_p, tb2_p, chw, thw, hb]


def _round_up(v, m):
    return (v + m - 1) // m * m


def tarnet_forward(x, t, params):
    n = x.shape[0]
    if n <= 8:
        tb = n
    else:
        # Keep at least 2 grid steps so the "parallel" batch axis can shard
        # across v7x's 2 TensorCores; cap at BATCH_TILE for large batches.
        tb = min(BATCH_TILE, _round_up(pl.cdiv(n, 2), 8))
    grid = (pl.cdiv(n, tb),)

    # Lane-align x rows (25 -> 32); padded columns hit zero weight rows.
    x_pad = jnp.pad(x, ((0, 0), (0, INPUT_PAD - INPUT_DIM)))
    weights = _pack_kernel_params(params)

    def batch_spec(dim):
        return pl.BlockSpec((tb, dim), lambda i: (i, 0))

    def resident_spec(arr):
        nd = arr.ndim
        # Constant index_map: weights stay resident in VMEM across the grid.
        # TODO(synk): pipeline_mode=pl.Buffered(1) would also drop the unused
        # second pipeline buffer for these never-refetched weights (extra
        # VMEM headroom on v7x's 64 MiB).
        return pl.BlockSpec(arr.shape, lambda i, _nd=nd: (0,) * _nd)

    in_specs = ([batch_spec(INPUT_PAD), batch_spec(1)]
                + [resident_spec(w) for w in weights])

    slab = pl.pallas_call(
        tarnet_kernel,
        grid=grid,
        out_shape=jax.ShapeDtypeStruct((n, HIDDEN_PAD), jnp.float32),
        in_specs=in_specs,
        out_specs=batch_spec(HIDDEN_PAD),
        compiler_params=pltpu.CompilerParams(
            dimension_semantics=("parallel",),
            vmem_limit_bytes=32 << 20,
        ),
    )(x_pad, t, *weights)

    # Wrapper-side unpack (XLA slices).  If downstream consumers can accept
    # the packed slab directly, pass it through instead to avoid the copies.
    y_pred = slab[:, Y_LANE:Y_LANE + 1]
    control_out = slab[:, C_LANE:C_LANE + 1]
    treatment_out = slab[:, T_LANE:T_LANE + 1]
    representation = slab[:, :HIDDEN_DIM]
    return y_pred, representation, control_out, treatment_out


def _init_linear(key, fan_in, fan_out):
    # Deterministic init mimicking PyTorch's default uniform(-1/sqrt(fan_in)).
    kw, kb = jax.random.split(key)
    bound = 1.0 / jnp.sqrt(float(fan_in))
    w = jax.random.uniform(kw, (fan_in, fan_out), jnp.float32, -bound, bound)
    b = jax.random.uniform(kb, (1, fan_out), jnp.float32, -bound, bound)
    return w, b


def init_params(key):
    keys = jax.random.split(key, 9)
    return {
        "rep": [
            _init_linear(keys[0], INPUT_DIM, HIDDEN_DIM),
            _init_linear(keys[1], HIDDEN_DIM, HIDDEN_DIM),
            _init_linear(keys[2], HIDDEN_DIM, HIDDEN_DIM),
        ],
        "control": [
            _init_linear(keys[3], HIDDEN_DIM, HIDDEN_DIM),
            _init_linear(keys[4], HIDDEN_DIM, HIDDEN_DIM),
            _init_linear(keys[5], HIDDEN_DIM, OUTPUT_DIM),
        ],
        "treatment": [
            _init_linear(keys[6], HIDDEN_DIM, HIDDEN_DIM),
            _init_linear(keys[7], HIDDEN_DIM, HIDDEN_DIM),
            _init_linear(keys[8], HIDDEN_DIM, OUTPUT_DIM),
        ],
    }


def tarnet_forward_ref(x, t, params):
    """Pure-JAX f32 reference for correctness checking."""
    def seq(h, layers, elu_last):
        n_layers = len(layers)
        for i, (w, b) in enumerate(layers):
            h = h @ w + b
            if elu_last or i < n_layers - 1:
                h = jnp.where(h > 0.0, h, jnp.exp(jnp.minimum(h, 0.0)) - 1.0)
        return h

    rep = seq(x, params["rep"], elu_last=True)
    c = seq(rep, params["control"], elu_last=False)
    tr = seq(rep, params["treatment"], elu_last=False)
    y = t * tr + (1.0 - t) * c
    return y, rep, c, tr


if __name__ == "__main__":
    key = jax.random.PRNGKey(0)
    k_params, k_data = jax.random.split(key)
    params = init_params(k_params)

    # batch=8: single-block path; batch=300: split tile (grid=2, partial last
    # tile); batch=1100: full 512-row tiles + a partial tail (grid=3).
    for batch in (8, 300, 1100):
        kx, kt = jax.random.split(jax.random.fold_in(k_data, batch))
        x = jax.random.normal(kx, (batch, INPUT_DIM), dtype=jnp.float32)
        t = (jax.random.uniform(kt, (batch, 1)) > 0.5).astype(jnp.float32)

        outs = jax.block_until_ready(tarnet_forward(x, t, params))
        refs = tarnet_forward_ref(x, t, params)

        names = ("y_pred", "representation", "control_out", "treatment_out")
        for name, got, want in zip(names, outs, refs):
            assert got.shape == want.shape, (name, got.shape, want.shape)
            # bf16 matmul inputs (f32 accumulation) => relaxed tolerance.
            assert jnp.allclose(got, want, atol=3e-2, rtol=3e-2), name

        y_pred, rep, c_out, t_out = outs
        assert y_pred.shape == (batch, OUTPUT_DIM)
        assert rep.shape == (batch, HIDDEN_DIM)

    print("KERNEL_OK")
</pallas_src>

<mosaic_0001>
module attributes {stable_mosaic.version = 11 : i64} {
  func.func @tarnet_kernel(%arg0: i32, %arg1: memref<8x32xf32, #tpu.memory_space<vmem>>, %arg2: memref<8x1xf32, #tpu.memory_space<vmem>>, %arg3: memref<32x256xbf16, #tpu.memory_space<vmem>>, %arg4: memref<1x256xf32, #tpu.memory_space<vmem>>, %arg5: memref<256x256xbf16, #tpu.memory_space<vmem>>, %arg6: memref<1x256xf32, #tpu.memory_space<vmem>>, %arg7: memref<256x256xbf16, #tpu.memory_space<vmem>>, %arg8: memref<1x256xf32, #tpu.memory_space<vmem>>, %arg9: memref<256x512xbf16, #tpu.memory_space<vmem>>, %arg10: memref<1x512xf32, #tpu.memory_space<vmem>>, %arg11: memref<256x256xbf16, #tpu.memory_space<vmem>>, %arg12: memref<1x256xf32, #tpu.memory_space<vmem>>, %arg13: memref<256x256xbf16, #tpu.memory_space<vmem>>, %arg14: memref<1x256xf32, #tpu.memory_space<vmem>>, %arg15: memref<256x256xbf16, #tpu.memory_space<vmem>>, %arg16: memref<256x256xbf16, #tpu.memory_space<vmem>>, %arg17: memref<1x256xf32, #tpu.memory_space<vmem>>, %arg18: memref<8x256xf32, #tpu.memory_space<vmem>>) attributes {dimension_semantics = [#tpu.dimension_semantics<parallel>], iteration_bounds = array<i64: 1>, scalar_prefetch = 0 : i64, scratch_operands = 0 : i64, tpu.core_type = #tpu.core_type<tc>, window_params = [{transform_indices = @transform_0, window_bounds = array<i64: 8, 32>}, {transform_indices = @transform_1, window_bounds = array<i64: 8, 1>}, {pipeline_mode = #tpu.pipeline_mode<synchronous>, transform_indices = @transform_2, window_bounds = array<i64: 32, 256>}, {pipeline_mode = #tpu.pipeline_mode<synchronous>, transform_indices = @transform_3, window_bounds = array<i64: 1, 256>}, {pipeline_mode = #tpu.pipeline_mode<synchronous>, transform_indices = @transform_4, window_bounds = array<i64: 256, 256>}, {pipeline_mode = #tpu.pipeline_mode<synchronous>, transform_indices = @transform_5, window_bounds = array<i64: 1, 256>}, {pipeline_mode = #tpu.pipeline_mode<synchronous>, transform_indices = @transform_6, window_bounds = array<i64: 256, 256>}, {pipeline_mode = #tpu.pipeline_mode<synchronous>, transform_indices = @transform_7, window_bounds = array<i64: 1, 256>}, {pipeline_mode = #tpu.pipeline_mode<synchronous>, transform_indices = @transform_8, window_bounds = array<i64: 256, 512>}, {pipeline_mode = #tpu.pipeline_mode<synchronous>, transform_indices = @transform_9, window_bounds = array<i64: 1, 512>}, {pipeline_mode = #tpu.pipeline_mode<synchronous>, transform_indices = @transform_10, window_bounds = array<i64: 256, 256>}, {pipeline_mode = #tpu.pipeline_mode<synchronous>, transform_indices = @transform_11, window_bounds = array<i64: 1, 256>}, {pipeline_mode = #tpu.pipeline_mode<synchronous>, transform_indices = @transform_12, window_bounds = array<i64: 256, 256>}, {pipeline_mode = #tpu.pipeline_mode<synchronous>, transform_indices = @transform_13, window_bounds = array<i64: 1, 256>}, {pipeline_mode = #tpu.pipeline_mode<synchronous>, transform_indices = @transform_14, window_bounds = array<i64: 256, 256>}, {pipeline_mode = #tpu.pipeline_mode<synchronous>, transform_indices = @transform_15, window_bounds = array<i64: 256, 256>}, {pipeline_mode = #tpu.pipeline_mode<synchronous>, transform_indices = @transform_16, window_bounds = array<i64: 1, 256>}, {transform_indices = @transform_17, window_bounds = array<i64: 8, 256>}]} {
    %c0 = arith.constant 0 : index
    %c0_0 = arith.constant 0 : index
    %0 = vector.load %arg1[%c0, %c0_0] : memref<8x32xf32, #tpu.memory_space<vmem>>, vector<8x32xf32>
    %1 = arith.truncf %0 : vector<8x32xf32> to vector<8x32xbf16>
    %c0_1 = arith.constant 0 : index
    %c0_2 = arith.constant 0 : index
    %2 = vector.load %arg3[%c0_1, %c0_2] : memref<32x256xbf16, #tpu.memory_space<vmem>>, vector<32x256xbf16>
    %cst = arith.constant dense<0.000000e+00> : vector<8x256xf32>
    %3 = tpu.matmul %1, %2, %cst {dimension_numbers = #tpu.dot_dimension_numbers<[1], [0], [0], [1], [0, 0, 1, 1], [], []>} : vector<8x32xbf16>, vector<32x256xbf16>, vector<8x256xf32> -> vector<8x256xf32>
    %c0_3 = arith.constant 0 : index
    %c0_4 = arith.constant 0 : index
    %4 = vector.load %arg4[%c0_3, %c0_4] : memref<1x256xf32, #tpu.memory_space<vmem>>, vector<1x256xf32>
    %5 = vector.broadcast %4 : vector<1x256xf32> to vector<8x256xf32>
    %6 = arith.addf %3, %5 : vector<8x256xf32>
    %cst_5 = arith.constant 0.000000e+00 : f32
    %7 = vector.broadcast %cst_5 : f32 to vector<8x256xf32>
    %8 = arith.cmpf ogt, %6, %7 : vector<8x256xf32>
    %9 = math.exp %6 : vector<8x256xf32>
    %cst_6 = arith.constant 1.000000e+00 : f32
    %10 = vector.broadcast %cst_6 : f32 to vector<8x256xf32>
    %11 = arith.subf %9, %10 : vector<8x256xf32>
    %12 = arith.select %8, %6, %11 : vector<8x256xi1>, vector<8x256xf32>
    %13 = arith.truncf %12 : vector<8x256xf32> to vector<8x256xbf16>
    %c0_7 = arith.constant 0 : index
    %c0_8 = arith.constant 0 : index
    %14 = vector.load %arg5[%c0_7, %c0_8] : memref<256x256xbf16, #tpu.memory_space<vmem>>, vector<256x256xbf16>
    %cst_9 = arith.constant dense<0.000000e+00> : vector<8x256xf32>
    %15 = tpu.matmul %13, %14, %cst_9 {dimension_numbers = #tpu.dot_dimension_numbers<[1], [0], [0], [1], [0, 0, 1, 1], [], []>} : vector<8x256xbf16>, vector<256x256xbf16>, vector<8x256xf32> -> vector<8x256xf32>
    %c0_10 = arith.constant 0 : index
    %c0_11 = arith.constant 0 : index
    %16 = vector.load %arg6[%c0_10, %c0_11] : memref<1x256xf32, #tpu.memory_space<vmem>>, vector<1x256xf32>
    %17 = vector.broadcast %16 : vector<1x256xf32> to vector<8x256xf32>
    %18 = arith.addf %15, %17 : vector<8x256xf32>
    %cst_12 = arith.constant 0.000000e+00 : f32
    %19 = vector.broadcast %cst_12 : f32 to vector<8x256xf32>
    %20 = arith.cmpf ogt, %18, %19 : vector<8x256xf32>
    %21 = math.exp %18 : vector<8x256xf32>
    %cst_13 = arith.constant 1.000000e+00 : f32
    %22 = vector.broadcast %cst_13 : f32 to vector<8x256xf32>
    %23 = arith.subf %21, %22 : vector<8x256xf32>
    %24 = arith.select %20, %18, %23 : vector<8x256xi1>, vector<8x256xf32>
    %25 = arith.truncf %24 : vector<8x256xf32> to vector<8x256xbf16>
    %c0_14 = arith.constant 0 : index
    %c0_15 = arith.constant 0 : index
    %26 = vector.load %arg7[%c0_14, %c0_15] : memref<256x256xbf16, #tpu.memory_space<vmem>>, vector<256x256xbf16>
    %cst_16 = arith.constant dense<0.000000e+00> : vector<8x256xf32>
    %27 = tpu.matmul %25, %26, %cst_16 {dimension_numbers = #tpu.dot_dimension_numbers<[1], [0], [0], [1], [0, 0, 1, 1], [], []>} : vector<8x256xbf16>, vector<256x256xbf16>, vector<8x256xf32> -> vector<8x256xf32>
    %c0_17 = arith.constant 0 : index
    %c0_18 = arith.constant 0 : index
    %28 = vector.load %arg8[%c0_17, %c0_18] : memref<1x256xf32, #tpu.memory_space<vmem>>, vector<1x256xf32>
    %29 = vector.broadcast %28 : vector<1x256xf32> to vector<8x256xf32>
    %30 = arith.addf %27, %29 : vector<8x256xf32>
    %cst_19 = arith.constant 0.000000e+00 : f32
    %31 = vector.broadcast %cst_19 : f32 to vector<8x256xf32>
    %32 = arith.cmpf ogt, %30, %31 : vector<8x256xf32>
    %33 = math.exp %30 : vector<8x256xf32>
    %cst_20 = arith.constant 1.000000e+00 : f32
    %34 = vector.broadcast %cst_20 : f32 to vector<8x256xf32>
    %35 = arith.subf %33, %34 : vector<8x256xf32>
    %36 = arith.select %32, %30, %35 : vector<8x256xi1>, vector<8x256xf32>
    %37 = arith.truncf %36 : vector<8x256xf32> to vector<8x256xbf16>
    %c0_21 = arith.constant 0 : index
    %c0_22 = arith.constant 0 : index
    %38 = vector.load %arg9[%c0_21, %c0_22] : memref<256x512xbf16, #tpu.memory_space<vmem>>, vector<256x512xbf16>
    %cst_23 = arith.constant dense<0.000000e+00> : vector<8x512xf32>
    %39 = tpu.matmul %37, %38, %cst_23 {dimension_numbers = #tpu.dot_dimension_numbers<[1], [0], [0], [1], [0, 0, 1, 1], [], []>} : vector<8x256xbf16>, vector<256x512xbf16>, vector<8x512xf32> -> vector<8x512xf32>
    %c0_24 = arith.constant 0 : index
    %c0_25 = arith.constant 0 : index
    %40 = vector.load %arg10[%c0_24, %c0_25] : memref<1x512xf32, #tpu.memory_space<vmem>>, vector<1x512xf32>
    %41 = vector.broadcast %40 : vector<1x512xf32> to vector<8x512xf32>
    %42 = arith.addf %39, %41 : vector<8x512xf32>
    %cst_26 = arith.constant 0.000000e+00 : f32
    %43 = vector.broadcast %cst_26 : f32 to vector<8x512xf32>
    %44 = arith.cmpf ogt, %42, %43 : vector<8x512xf32>
    %45 = math.exp %42 : vector<8x512xf32>
    %cst_27 = arith.constant 1.000000e+00 : f32
    %46 = vector.broadcast %cst_27 : f32 to vector<8x512xf32>
    %47 = arith.subf %45, %46 : vector<8x512xf32>
    %48 = arith.select %44, %42, %47 : vector<8x512xi1>, vector<8x512xf32>
    %49 = vector.extract_strided_slice %48 {offsets = [0, 0], sizes = [8, 256], strides = [1, 1]} : vector<8x512xf32> to vector<8x256xf32>
    %50 = arith.truncf %49 : vector<8x256xf32> to vector<8x256xbf16>
    %c0_28 = arith.constant 0 : index
    %c0_29 = arith.constant 0 : index
    %51 = vector.load %arg11[%c0_28, %c0_29] : memref<256x256xbf16, #tpu.memory_space<vmem>>, vector<256x256xbf16>
    %cst_30 = arith.constant dense<0.000000e+00> : vector<8x256xf32>
    %52 = tpu.matmul %50, %51, %cst_30 {dimension_numbers = #tpu.dot_dimension_numbers<[1], [0], [0], [1], [0, 0, 1, 1], [], []>} : vector<8x256xbf16>, vector<256x256xbf16>, vector<8x256xf32> -> vector<8x256xf32>
    %c0_31 = arith.constant 0 : index
    %c0_32 = arith.constant 0 : index
    %53 = vector.load %arg12[%c0_31, %c0_32] : memref<1x256xf32, #tpu.memory_space<vmem>>, vector<1x256xf32>
    %54 = vector.broadcast %53 : vector<1x256xf32> to vector<8x256xf32>
    %55 = arith.addf %52, %54 : vector<8x256xf32>
    %cst_33 = arith.constant 0.000000e+00 : f32
    %56 = vector.broadcast %cst_33 : f32 to vector<8x256xf32>
    %57 = arith.cmpf ogt, %55, %56 : vector<8x256xf32>
    %58 = math.exp %55 : vector<8x256xf32>
    %cst_34 = arith.constant 1.000000e+00 : f32
    %59 = vector.broadcast %cst_34 : f32 to vector<8x256xf32>
    %60 = arith.subf %58, %59 : vector<8x256xf32>
    %61 = arith.select %57, %55, %60 : vector<8x256xi1>, vector<8x256xf32>
    %62 = vector.extract_strided_slice %48 {offsets = [0, 256], sizes = [8, 256], strides = [1, 1]} : vector<8x512xf32> to vector<8x256xf32>
    %63 = arith.truncf %62 : vector<8x256xf32> to vector<8x256xbf16>
    %c0_35 = arith.constant 0 : index
    %c0_36 = arith.constant 0 : index
    %64 = vector.load %arg13[%c0_35, %c0_36] : memref<256x256xbf16, #tpu.memory_space<vmem>>, vector<256x256xbf16>
    %cst_37 = arith.constant dense<0.000000e+00> : vector<8x256xf32>
    %65 = tpu.matmul %63, %64, %cst_37 {dimension_numbers = #tpu.dot_dimension_numbers<[1], [0], [0], [1], [0, 0, 1, 1], [], []>} : vector<8x256xbf16>, vector<256x256xbf16>, vector<8x256xf32> -> vector<8x256xf32>
    %c0_38 = arith.constant 0 : index
    %c0_39 = arith.constant 0 : index
    %66 = vector.load %arg14[%c0_38, %c0_39] : memref<1x256xf32, #tpu.memory_space<vmem>>, vector<1x256xf32>
    %67 = vector.broadcast %66 : vector<1x256xf32> to vector<8x256xf32>
    %68 = arith.addf %65, %67 : vector<8x256xf32>
    %cst_40 = arith.constant 0.000000e+00 : f32
    %69 = vector.broadcast %cst_40 : f32 to vector<8x256xf32>
    %70 = arith.cmpf ogt, %68, %69 : vector<8x256xf32>
    %71 = math.exp %68 : vector<8x256xf32>
    %cst_41 = arith.constant 1.000000e+00 : f32
    %72 = vector.broadcast %cst_41 : f32 to vector<8x256xf32>
    %73 = arith.subf %71, %72 : vector<8x256xf32>
    %74 = arith.select %70, %68, %73 : vector<8x256xi1>, vector<8x256xf32>
    %75 = arith.truncf %61 : vector<8x256xf32> to vector<8x256xbf16>
    %c0_42 = arith.constant 0 : index
    %c0_43 = arith.constant 0 : index
    %76 = vector.load %arg15[%c0_42, %c0_43] : memref<256x256xbf16, #tpu.memory_space<vmem>>, vector<256x256xbf16>
    %cst_44 = arith.constant dense<0.000000e+00> : vector<8x256xf32>
    %77 = tpu.matmul %75, %76, %cst_44 {dimension_numbers = #tpu.dot_dimension_numbers<[1], [0], [0], [1], [0, 0, 1, 1], [], []>} : vector<8x256xbf16>, vector<256x256xbf16>, vector<8x256xf32> -> vector<8x256xf32>
    %78 = arith.truncf %74 : vector<8x256xf32> to vector<8x256xbf16>
    %c0_45 = arith.constant 0 : index
    %c0_46 = arith.constant 0 : index
    %79 = vector.load %arg16[%c0_45, %c0_46] : memref<256x256xbf16, #tpu.memory_space<vmem>>, vector<256x256xbf16>
    %cst_47 = arith.constant dense<0.000000e+00> : vector<8x256xf32>
    %80 = tpu.matmul %78, %79, %cst_47 {dimension_numbers = #tpu.dot_dimension_numbers<[1], [0], [0], [1], [0, 0, 1, 1], [], []>} : vector<8x256xbf16>, vector<256x256xbf16>, vector<8x256xf32> -> vector<8x256xf32>
    %81 = arith.addf %77, %80 : vector<8x256xf32>
    %c0_48 = arith.constant 0 : index
    %c0_49 = arith.constant 0 : index
    %82 = vector.load %arg17[%c0_48, %c0_49] : memref<1x256xf32, #tpu.memory_space<vmem>>, vector<1x256xf32>
    %83 = vector.broadcast %82 : vector<1x256xf32> to vector<8x256xf32>
    %84 = arith.addf %81, %83 : vector<8x256xf32>
    %85 = vector.extract_strided_slice %84 {offsets = [0, 254], sizes = [8, 1], strides = [1, 1]} : vector<8x256xf32> to vector<8x1xf32>
    %86 = vector.extract_strided_slice %84 {offsets = [0, 255], sizes = [8, 1], strides = [1, 1]} : vector<8x256xf32> to vector<8x1xf32>
    %c0_50 = arith.constant 0 : index
    %c0_51 = arith.constant 0 : index
    %87 = vector.load %arg2[%c0_50, %c0_51] : memref<8x1xf32, #tpu.memory_space<vmem>>, vector<8x1xf32>
    %88 = arith.mulf %87, %86 : vector<8x1xf32>
    %cst_52 = arith.constant 1.000000e+00 : f32
    %89 = vector.broadcast %cst_52 : f32 to vector<8x1xf32>
    %90 = arith.subf %89, %87 : vector<8x1xf32>
    %91 = arith.mulf %90, %85 : vector<8x1xf32>
    %92 = arith.addf %88, %91 : vector<8x1xf32>
    %93 = arith.addf %36, %84 : vector<8x256xf32>
    %94 = tpu.iota {dimensions = array<i32: 1>} : vector<8x256xi32>
    %c253_i32 = arith.constant 253 : i32
    %95 = vector.broadcast %c253_i32 : i32 to vector<8x256xi32>
    %96 = arith.cmpi eq, %94, %95 : vector<8x256xi32>
    %97 = vector.shape_cast %92 : vector<8x1xf32> to vector<8x1xf32>
    %98 = vector.broadcast %97 : vector<8x1xf32> to vector<8x256xf32>
    %99 = arith.select %96, %98, %93 : vector<8x256xi1>, vector<8x256xf32>
    %c0_53 = arith.constant 0 : index
    %c0_54 = arith.constant 0 : index
    %100 = vector.load %arg18[%c0_53, %c0_54] : memref<8x256xf32, #tpu.memory_space<vmem>>, vector<8x256xf32>
    tpu.vector_store %arg18[%c0_53, %c0_54], %99 {strides = array<i32>} : memref<8x256xf32, #tpu.memory_space<vmem>>, vector<8x256xf32>,
    return
  }
  func.func @transform_0(%arg0: i32) -> (i32, i32) {
    %c0_i32 = arith.constant 0 : i32
    %c0_i32_0 = arith.constant 0 : i32
    return %arg0, %c0_i32 : i32, i32
  }
  func.func @transform_1(%arg0: i32) -> (i32, i32) {
    %c0_i32 = arith.constant 0 : i32
    %c0_i32_0 = arith.constant 0 : i32
    return %arg0, %c0_i32 : i32, i32
  }
  func.func @transform_2(%arg0: i32) -> (i32, i32) {
    %c0_i32 = arith.constant 0 : i32
    %c0_i32_0 = arith.constant 0 : i32
    %c0_i32_1 = arith.constant 0 : i32
    return %c0_i32, %c0_i32_0 : i32, i32
  }
  func.func @transform_3(%arg0: i32) -> (i32, i32) {
    %c0_i32 = arith.constant 0 : i32
    %c0_i32_0 = arith.constant 0 : i32
    %c0_i32_1 = arith.constant 0 : i32
    return %c0_i32, %c0_i32_0 : i32, i32
  }
  func.func @transform_4(%arg0: i32) -> (i32, i32) {
    %c0_i32 = arith.constant 0 : i32
    %c0_i32_0 = arith.constant 0 : i32
    %c0_i32_1 = arith.constant 0 : i32
    return %c0_i32, %c0_i32_0 : i32, i32
  }
  func.func @transform_5(%arg0: i32) -> (i32, i32) {
    %c0_i32 = arith.constant 0 : i32
    %c0_i32_0 = arith.constant 0 : i32
    %c0_i32_1 = arith.constant 0 : i32
    return %c0_i32, %c0_i32_0 : i32, i32
  }
  func.func @transform_6(%arg0: i32) -> (i32, i32) {
    %c0_i32 = arith.constant 0 : i32
    %c0_i32_0 = arith.constant 0 : i32
    %c0_i32_1 = arith.constant 0 : i32
    return %c0_i32, %c0_i32_0 : i32, i32
  }
  func.func @transform_7(%arg0: i32) -> (i32, i32) {
    %c0_i32 = arith.constant 0 : i32
    %c0_i32_0 = arith.constant 0 : i32
    %c0_i32_1 = arith.constant 0 : i32
    return %c0_i32, %c0_i32_0 : i32, i32
  }
  func.func @transform_8(%arg0: i32) -> (i32, i32) {
    %c0_i32 = arith.constant 0 : i32
    %c0_i32_0 = arith.constant 0 : i32
    %c0_i32_1 = arith.constant 0 : i32
    return %c0_i32, %c0_i32_0 : i32, i32
  }
  func.func @transform_9(%arg0: i32) -> (i32, i32) {
    %c0_i32 = arith.constant 0 : i32
    %c0_i32_0 = arith.constant 0 : i32
    %c0_i32_1 = arith.constant 0 : i32
    return %c0_i32, %c0_i32_0 : i32, i32
  }
  func.func @transform_10(%arg0: i32) -> (i32, i32) {
    %c0_i32 = arith.constant 0 : i32
    %c0_i32_0 = arith.constant 0 : i32
    %c0_i32_1 = arith.constant 0 : i32
    return %c0_i32, %c0_i32_0 : i32, i32
  }
  func.func @transform_11(%arg0: i32) -> (i32, i32) {
    %c0_i32 = arith.constant 0 : i32
    %c0_i32_0 = arith.constant 0 : i32
    %c0_i32_1 = arith.constant 0 : i32
    return %c0_i32, %c0_i32_0 : i32, i32
  }
  func.func @transform_12(%arg0: i32) -> (i32, i32) {
    %c0_i32 = arith.constant 0 : i32
    %c0_i32_0 = arith.constant 0 : i32
    %c0_i32_1 = arith.constant 0 : i32
    return %c0_i32, %c0_i32_0 : i32, i32
  }
  func.func @transform_13(%arg0: i32) -> (i32, i32) {
    %c0_i32 = arith.constant 0 : i32
    %c0_i32_0 = arith.constant 0 : i32
    %c0_i32_1 = arith.constant 0 : i32
    return %c0_i32, %c0_i32_0 : i32, i32
  }
  func.func @transform_14(%arg0: i32) -> (i32, i32) {
    %c0_i32 = arith.constant 0 : i32
    %c0_i32_0 = arith.constant 0 : i32
    %c0_i32_1 = arith.constant 0 : i32
    return %c0_i32, %c0_i32_0 : i32, i32
  }
  func.func @transform_15(%arg0: i32) -> (i32, i32) {
    %c0_i32 = arith.constant 0 : i32
    %c0_i32_0 = arith.constant 0 : i32
    %c0_i32_1 = arith.constant 0 : i32
    return %c0_i32, %c0_i32_0 : i32, i32
  }
  func.func @transform_16(%arg0: i32) -> (i32, i32) {
    %c0_i32 = arith.constant 0 : i32
    %c0_i32_0 = arith.constant 0 : i32
    %c0_i32_1 = arith.constant 0 : i32
    return %c0_i32, %c0_i32_0 : i32, i32
  }
  func.func @transform_17(%arg0: i32) -> (i32, i32) {
    %c0_i32 = arith.constant 0 : i32
    %c0_i32_0 = arith.constant 0 : i32
    return %arg0, %c0_i32 : i32, i32
  }
}

</mosaic_0001>

<llo_original>
// kernel: tpu_custom_call.1
$region0: #{tpu_custom_call.1}
  #allocation0 [shape = 'u32[]', space=smem, size = 0x4, offset = 0x4, fixed_abs, tag = 'smem constant byte address 0x4 - core index']
  #allocation1 [shape = 'u32[144,128]{1,0:T(1,128)}', space=vmem, size = 0x12000, scoped, tag = 'internal scratch']
  %s0 = inlined_call_operand.vmem [shape: f32[8,32], index: 0, kind: input, shape index: {}]
  %s1 = inlined_call_operand.vmem [shape: f32[8,1], index: 1, kind: input, shape index: {}]
  %s2 = inlined_call_operand.hbm [shape: bf16[32,256], index: 2, kind: input, shape index: {}]
  %s3 = inlined_call_operand.vmem [shape: f32[1,256], index: 3, kind: input, shape index: {}]
  %s4 = inlined_call_operand.hbm [shape: bf16[256,256], index: 4, kind: input, shape index: {}]
  %s5 = inlined_call_operand.vmem [shape: f32[1,256], index: 5, kind: input, shape index: {}]
  %s6 = inlined_call_operand.hbm [shape: bf16[256,256], index: 6, kind: input, shape index: {}]
  %s7 = inlined_call_operand.vmem [shape: f32[1,256], index: 7, kind: input, shape index: {}]
  %s8 = inlined_call_operand.hbm [shape: bf16[256,512], index: 8, kind: input, shape index: {}]
  %s9 = inlined_call_operand.vmem [shape: f32[1,512], index: 9, kind: input, shape index: {}]
  %s10 = inlined_call_operand.hbm [shape: bf16[256,256], index: 10, kind: input, shape index: {}]
  %s11 = inlined_call_operand.vmem [shape: f32[1,256], index: 11, kind: input, shape index: {}]
  %s12 = inlined_call_operand.hbm [shape: bf16[256,256], index: 12, kind: input, shape index: {}]
  %s13 = inlined_call_operand.vmem [shape: f32[1,256], index: 13, kind: input, shape index: {}]
  %s14 = inlined_call_operand.hbm [shape: bf16[256,256], index: 14, kind: input, shape index: {}]
  %s15 = inlined_call_operand.hbm [shape: bf16[256,256], index: 15, kind: input, shape index: {}]
  %s16 = inlined_call_operand.vmem [shape: f32[1,256], index: 16, kind: input, shape index: {}]
  %s17 = inlined_call_operand.hbm [shape: f32[8,256], index: 17, kind: output, shape index: {}]
  %s18 = sld [smem:[#allocation0]]
  $region110: #{tpu_custom_call.1} parent=0
    _
  %s20 = ssub.s32 1, %s18
  %s21 = scalar_select 0, %s20, %s18
  $region1: #{tpu_custom_call.1} parent=0
    #allocation2 [shape = 'u8[16384]{0}', space=vmem, size = 0x4000, scoped, tag = 'input window, operand 2, single buffered']
    #allocation3 [shape = 's32[1]{0}', space=sflag, size = 0x4, scoped, tag = 'scoped memory for tpu_custom_call.1']
    #allocation4 [shape = 's32[1]{0}', space=sflag, size = 0x4, scoped, tag = 'scoped memory for tpu_custom_call.1']
    #allocation5 [shape = 'u8[131072]{0}', space=vmem, size = 0x20000, scoped, tag = 'input window, operand 4, single buffered']
    #allocation6 [shape = 's32[1]{0}', space=sflag, size = 0x4, scoped, tag = 'scoped memory for tpu_custom_call.1']
    #allocation7 [shape = 'u8[131072]{0}', space=vmem, size = 0x20000, scoped, tag = 'input window, operand 6, single buffered']
    #allocation8 [shape = 'u8[262144]{0}', space=vmem, size = 0x40000, scoped, tag = 'input window, operand 8, single buffered']
    #allocation9 [shape = 's32[1]{0}', space=sflag, size = 0x4, scoped, tag = 'scoped memory for tpu_custom_call.1']
    #allocation10 [shape = 'u8[131072]{0}', space=vmem, size = 0x20000, scoped, tag = 'input window, operand 10, single buffered']
    #allocation11 [shape = 'u8[131072]{0}', space=vmem, size = 0x20000, scoped, tag = 'input window, operand 12, single buffered']
    #allocation12 [shape = 's32[1]{0}', space=sflag, size = 0x4, scoped, tag = 'scoped memory for tpu_custom_call.1']
    #allocation13 [shape = 'u8[131072]{0}', space=vmem, size = 0x20000, scoped, tag = 'input window, operand 14, single buffered']
    #allocation14 [shape = 'u8[131072]{0}', space=vmem, size = 0x20000, scoped, tag = 'input window, operand 15, single buffered']
    #allocation15 [shape = 's32[1]{0}', space=sflag, size = 0x4, scoped, tag = 'scoped memory for tpu_custom_call.1']
    #allocation16 [shape = 'u8[8192]{0}', space=vmem, size = 0x2000, scoped, tag = 'output window, operand 0, single buffered']
    %22 = vsyncpa [#allocation3], 0
    %23 = vsyncpa [#allocation6], 0
    %24 = vsyncpa [#allocation9], 0
    %25 = vsyncpa [#allocation12], 0
    %26 = vsyncpa [#allocation15], 0
    %27 = vsyncpa [#allocation4], 0
    // Predicated region
    $region2: #{tpu_custom_call.1} parent=1 // pred_check
      _
    $region3: #{tpu_custom_call.1} parent=1 // pred_check_branch
      %29 = sbr.rel (0) target = $region5
    $region4: #{tpu_custom_call.1} parent=1 // pred_region
      _
    $region5: #{tpu_custom_call.1} parent=1 // pred_fallthru
      _
    // Predicated region
    $region6: #{tpu_custom_call.1} parent=1 // pred_check
      _
    $region7: #{tpu_custom_call.1} parent=1 // pred_check_branch
      %31 = sbr.rel (0) target = $region9
    $region8: #{tpu_custom_call.1} parent=1 // pred_region
      _
    $region9: #{tpu_custom_call.1} parent=1 // pred_fallthru
      _
    // Predicated region
    $region10: #{tpu_custom_call.1} parent=1 // pred_check
      _
    $region11: #{tpu_custom_call.1} parent=1 // pred_check_branch
      %33 = sbr.rel (0) target = $region13
    $region12: #{tpu_custom_call.1} parent=1 // pred_region
      %s35 = ssub.s32 512, 512
      %36 = vsyncadd [#allocation3], %s35
      %s37 = sshll.u32 [#allocation2], 4
      %s38 = int_to_ptr.vmem [resolvable:$true] %s37
      %43 = dma.hbm_to_vmem [thread:$0]  %s2, 512, %s38, [#allocation3], 128, 128, 8
    $region13: #{tpu_custom_call.1} parent=1 // pred_fallthru
      _
    // Predicated region
    $region14: #{tpu_custom_call.1} parent=1 // pred_check
      _
    $region15: #{tpu_custom_call.1} parent=1 // pred_check_branch
      %45 = sbr.rel (0) target = $region17
    $region16: #{tpu_custom_call.1} parent=1 // pred_region
      _
    $region17: #{tpu_custom_call.1} parent=1 // pred_fallthru
      _
    // Predicated region
    $region18: #{tpu_custom_call.1} parent=1 // pred_check
      _
    $region19: #{tpu_custom_call.1} parent=1 // pred_check_branch
      %47 = sbr.rel (0) target = $region21
    $region20: #{tpu_custom_call.1} parent=1 // pred_region
      %s49 = ssub.s32 4096, 4096
      %50 = vsyncadd [#allocation6], %s49
      %s51 = sshll.u32 [#allocation5], 4
      %s52 = int_to_ptr.vmem [resolvable:$true] %s51
      %57 = dma.hbm_to_vmem [thread:$0]  %s4, 4096, %s52, [#allocation6], 128, 128, 8
    $region21: #{tpu_custom_call.1} parent=1 // pred_fallthru
      _
    // Predicated region
    $region22: #{tpu_custom_call.1} parent=1 // pred_check
      _
    $region23: #{tpu_custom_call.1} parent=1 // pred_check_branch
      %59 = sbr.rel (0) target = $region25
    $region24: #{tpu_custom_call.1} parent=1 // pred_region
      _
    $region25: #{tpu_custom_call.1} parent=1 // pred_fallthru
      _
    // Predicated region
    $region26: #{tpu_custom_call.1} parent=1 // pred_check
      _
    $region27: #{tpu_custom_call.1} parent=1 // pred_check_branch
      %61 = sbr.rel (0) target = $region29
    $region28: #{tpu_custom_call.1} parent=1 // pred_region
      %s63 = ssub.s32 4096, 4096
      %64 = vsyncadd [#allocation6], %s63
      %s65 = sshll.u32 [#allocation7], 4
      %s66 = int_to_ptr.vmem [resolvable:$true] %s65
      %71 = dma.hbm_to_vmem [thread:$0]  %s6, 4096, %s66, [#allocation6], 128, 128, 8
    $region29: #{tpu_custom_call.1} parent=1 // pred_fallthru
      _
    // Predicated region
    $region30: #{tpu_custom_call.1} parent=1 // pred_check
      _
    $region31: #{tpu_custom_call.1} parent=1 // pred_check_branch
      %73 = sbr.rel (0) target = $region33
    $region32: #{tpu_custom_call.1} parent=1 // pred_region
      _
    $region33: #{tpu_custom_call.1} parent=1 // pred_fallthru
      _
    // Predicated region
    $region34: #{tpu_custom_call.1} parent=1 // pred_check
      _
    $region35: #{tpu_custom_call.1} parent=1 // pred_check_branch
      %75 = sbr.rel (0) target = $region37
    $region36: #{tpu_custom_call.1} parent=1 // pred_region
      %s77 = ssub.s32 8192, 8192
      %78 = vsyncadd [#allocation9], %s77
      %s79 = sshll.u32 [#allocation8], 4
      %s80 = int_to_ptr.vmem [resolvable:$true] %s79
      %85 = dma.hbm_to_vmem [thread:$0]  %s8, 8192, %s80, [#allocation9], 256, 256, 16
    $region37: #{tpu_custom_call.1} parent=1 // pred_fallthru
      _
    // Predicated region
    $region38: #{tpu_custom_call.1} parent=1 // pred_check
      _
    $region39: #{tpu_custom_call.1} parent=1 // pred_check_branch
      %87 = sbr.rel (0) target = $region41
    $region40: #{tpu_custom_call.1} parent=1 // pred_region
      _
    $region41: #{tpu_custom_call.1} parent=1 // pred_fallthru
      _
    // Predicated region
    $region42: #{tpu_custom_call.1} parent=1 // pred_check
      _
    $region43: #{tpu_custom_call.1} parent=1 // pred_check_branch
      %89 = sbr.rel (0) target = $region45
    $region44: #{tpu_custom_call.1} parent=1 // pred_region
      %s91 = ssub.s32 4096, 4096
      %92 = vsyncadd [#allocation9], %s91
      %s93 = sshll.u32 [#allocation10], 4
      %s94 = int_to_ptr.vmem [resolvable:$true] %s93
      %99 = dma.hbm_to_vmem [thread:$0]  %s10, 4096, %s94, [#allocation9], 128, 128, 8
    $region45: #{tpu_custom_call.1} parent=1 // pred_fallthru
      _
    // Predicated region
    $region46: #{tpu_custom_call.1} parent=1 // pred_check
      _
    $region47: #{tpu_custom_call.1} parent=1 // pred_check_branch
      %101 = sbr.rel (0) target = $region49
    $region48: #{tpu_custom_call.1} parent=1 // pred_region
      _
    $region49: #{tpu_custom_call.1} parent=1 // pred_fallthru
      _
    // Predicated region
    $region50: #{tpu_custom_call.1} parent=1 // pred_check
      _
    $region51: #{tpu_custom_call.1} parent=1 // pred_check_branch
      %103 = sbr.rel (0) target = $region53
    $region52: #{tpu_custom_call.1} parent=1 // pred_region
      %s105 = ssub.s32 4096, 4096
      %106 = vsyncadd [#allocation12], %s105
      %s107 = sshll.u32 [#allocation11], 4
      %s108 = int_to_ptr.vmem [resolvable:$true] %s107
      %113 = dma.hbm_to_vmem [thread:$0]  %s12, 4096, %s108, [#allocation12], 128, 128, 8
    $region53: #{tpu_custom_call.1} parent=1 // pred_fallthru
      _
    // Predicated region
    $region54: #{tpu_custom_call.1} parent=1 // pred_check
      _
    $region55: #{tpu_custom_call.1} parent=1 // pred_check_branch
      %115 = sbr.rel (0) target = $region57
    $region56: #{tpu_custom_call.1} parent=1 // pred_region
      _
    $region57: #{tpu_custom_call.1} parent=1 // pred_fallthru
      _
    // Predicated region
    $region58: #{tpu_custom_call.1} parent=1 // pred_check
      _
    $region59: #{tpu_custom_call.1} parent=1 // pred_check_branch
      %117 = sbr.rel (0) target = $region61
    $region60: #{tpu_custom_call.1} parent=1 // pred_region
      %s119 = ssub.s32 4096, 4096
      %120 = vsyncadd [#allocation12], %s119
      %s121 = sshll.u32 [#allocation13], 4
      %s122 = int_to_ptr.vmem [resolvable:$true] %s121
      %127 = dma.hbm_to_vmem [thread:$0]  %s14, 4096, %s122, [#allocation12], 128, 128, 8
    $region61: #{tpu_custom_call.1} parent=1 // pred_fallthru
      _
    // Predicated region
    $region62: #{tpu_custom_call.1} parent=1 // pred_check
      _
    $region63: #{tpu_custom_call.1} parent=1 // pred_check_branch
      %129 = sbr.rel (0) target = $region65
    $region64: #{tpu_custom_call.1} parent=1 // pred_region
      %s131 = ssub.s32 4096, 4096
      %132 = vsyncadd [#allocation15], %s131
      %s133 = sshll.u32 [#allocation14], 4
      %s134 = int_to_ptr.vmem [resolvable:$true] %s133
      %139 = dma.hbm_to_vmem [thread:$0]  %s15, 4096, %s134, [#allocation15], 128, 128, 8
    $region65: #{tpu_custom_call.1} parent=1 // pred_fallthru
      _
    // Predicated region
    $region66: #{tpu_custom_call.1} parent=1 // pred_check
      _
    $region67: #{tpu_custom_call.1} parent=1 // pred_check_branch
      %141 = sbr.rel (0) target = $region69
    $region68: #{tpu_custom_call.1} parent=1 // pred_region
      _
    $region69: #{tpu_custom_call.1} parent=1 // pred_fallthru
      _
    // Predicated region
    $region70: #{tpu_custom_call.1} parent=1 // pred_check
      _
    $region71: #{tpu_custom_call.1} parent=1 // pred_check_branch
      %143 = sbr.rel (0) target = $region73
    $region72: #{tpu_custom_call.1} parent=1 // pred_region
      %144 = dma.done [#allocation3], 512
    $region73: #{tpu_custom_call.1} parent=1 // pred_fallthru
      _
    // Predicated region
    $region74: #{tpu_custom_call.1} parent=1 // pred_check
      _
    $region75: #{tpu_custom_call.1} parent=1 // pred_check_branch
      %146 = sbr.rel (0) target = $region77
    $region76: #{tpu_custom_call.1} parent=1 // pred_region
      %147 = dma.done [#allocation6], 4096
    $region77: #{tpu_custom_call.1} parent=1 // pred_fallthru
      _
    // Predicated region
    $region78: #{tpu_custom_call.1} parent=1 // pred_check
      _
    $region79: #{tpu_custom_call.1} parent=1 // pred_check_branch
      %149 = sbr.rel (0) target = $region81
    $region80: #{tpu_custom_call.1} parent=1 // pred_region
      %150 = dma.done [#allocation6], 4096
    $region81: #{tpu_custom_call.1} parent=1 // pred_fallthru
      _
    // Predicated region
    $region82: #{tpu_custom_call.1} parent=1 // pred_check
      _
    $region83: #{tpu_custom_call.1} parent=1 // pred_check_branch
      %152 = sbr.rel (0) target = $region85
    $region84: #{tpu_custom_call.1} parent=1 // pred_region
      %153 = dma.done [#allocation9], 8192
    $region85: #{tpu_custom_call.1} parent=1 // pred_fallthru
      _
    // Predicated region
    $region86: #{tpu_custom_call.1} parent=1 // pred_check
      _
    $region87: #{tpu_custom_call.1} parent=1 // pred_check_branch
      %155 = sbr.rel (0) target = $region89
    $region88: #{tpu_custom_call.1} parent=1 // pred_region
      %156 = dma.done [#allocation9], 4096
    $region89: #{tpu_custom_call.1} parent=1 // pred_fallthru
      _
    // Predicated region
    $region90: #{tpu_custom_call.1} parent=1 // pred_check
      _
    $region91: #{tpu_custom_call.1} parent=1 // pred_check_branch
      %158 = sbr.rel (0) target = $region93
    $region92: #{tpu_custom_call.1} parent=1 // pred_region
      %159 = dma.done [#allocation12], 4096
    $region93: #{tpu_custom_call.1} parent=1 // pred_fallthru
      _
    // Predicated region
    $region94: #{tpu_custom_call.1} parent=1 // pred_check
      _
    $region95: #{tpu_custom_call.1} parent=1 // pred_check_branch
      %161 = sbr.rel (0) target = $region97
    $region96: #{tpu_custom_call.1} parent=1 // pred_region
      %162 = dma.done [#allocation12], 4096
    $region97: #{tpu_custom_call.1} parent=1 // pred_fallthru
      _
    // Predicated region
    $region98: #{tpu_custom_call.1} parent=1 // pred_check
      _
    $region99: #{tpu_custom_call.1} parent=1 // pred_check_branch
      %164 = sbr.rel (0) target = $region101
    $region100: #{tpu_custom_call.1} parent=1 // pred_region
      %165 = dma.done [#allocation15], 4096
    $region101: #{tpu_custom_call.1} parent=1 // pred_fallthru
      _
    %v167 = vld [vmem:[%s0] sm:$0xff]
    %v168 = vpack.c.bf16 %v167, %v167
    %v169 = vld [vmem:[#allocation2] sm:$0xff]
    %v170 = vld [vmem:[#allocation2 + $0x8] sm:$0xff]
    %v171 = vld [vmem:[#allocation2 + $0x10] sm:$0xff]
    %v172 = vld [vmem:[#allocation2 + $0x18] sm:$0xff]
    %v173 = vld [vmem:[%s3] sm:$0x3]
    %v175 = vlaneseq
    %v176 = vshrl.u32 %v175, 7
    %v177 = vsub.s32 0, %v176
    %v178 = vrot.slane %v173, %v177
    %v179 = vlaneseq
    %v180 = vshrl.u32 %v179, 7
    %v181 = vsub.s32 1, %v180
    %v182 = vrot.slane %v173, %v181
    %v189 = vunpack.c.l.b16 %v169
    %v190 = vunpack.c.h.b16 %v169
    %v191 = vunpack.c.l.b16 %v170
    %v192 = vunpack.c.h.b16 %v170
    %v193 = vunpack.c.l.b16 %v171
    %v194 = vunpack.c.h.b16 %v171
    %v195 = vunpack.c.l.b16 %v172
    %v196 = vunpack.c.h.b16 %v172
    %v197 = vpack.c.b16 %v191, %v189
    %v198 = vpack.c.b16 %v192, %v190
    %v199 = vpack.c.b16 %v195, %v193
    %v200 = vpack.c.b16 %v196, %v194
    %vm205 = vcmask 261120
    %v207 = vsel %vm205, %v168, 0
    %209 = vmatprep.subr.bf16.mxu0 %v198
    %210 = vmatpush1.bf16.msra.mxu0 %v197
    %211 = vmatprep.subr.bf16.mxu0 %v200
    %212 = vmatpush1.bf16.msra.mxu0 %v199
    %213 = vmatprep.subr.bf16.mxu0 0
    %214 = vmatpush1.bf16.msra.mxu0 0
    %215 = vmatprep.subr.bf16.mxu0 0
    %216 = vmatpush1.bf16.msra.mxu0 0
    %217 = vmatprep.subr.bf16.mxu0 0
    %218 = vmatpush1.bf16.msra.mxu0 0
    %219 = vmatprep.subr.bf16.mxu0 0
    %220 = vmatpush1.bf16.msra.mxu0 0
    %221 = vmatprep.subr.bf16.mxu0 0
    %222 = vmatpush1.bf16.msra.mxu0 0
    %223 = vmatprep.subr.bf16.mxu0 0
    %224 = vmatpush1.bf16.msra.mxu0 0
    %225 = vmatprep.subr.bf16.mxu0 0
    %226 = vmatpush1.bf16.msra.mxu0 0
    %227 = vmatprep.subr.bf16.mxu0 0
    %228 = vmatpush1.bf16.msra.mxu0 0
    %229 = vmatprep.subr.bf16.mxu0 0
    %230 = vmatpush1.bf16.msra.mxu0 0
    %231 = vmatprep.subr.bf16.mxu0 0
    %232 = vmatpush1.bf16.msra.mxu0 0
    %233 = vmatprep.subr.bf16.mxu0 0
    %234 = vmatpush1.bf16.msra.mxu0 0
    %235 = vmatprep.subr.bf16.mxu0 0
    %236 = vmatpush1.bf16.msra.mxu0 0
    %237 = vmatprep.subr.bf16.mxu0 0
    %238 = vmatpush1.bf16.msra.mxu0 0
    %239 = vmatprep.subr.bf16.mxu0 0
    %240 = vmatpush1.bf16.msra.mxu0 0
    %241 = vmatprep.mubr.bf16.mxu0 0
    %242 = vmatmul.mubr.bf16.gmra.mrb[0].mxu0 %v207
    %v243 = vpop.f32.mrb[0].mxu0
    %v244 = vadd.f32 %v178, %v243
    %v245 = vpop.f32.mrb[0].mxu0
    %v246 = vadd.f32 %v182, %v245
    %v247 = vpop.f32.mrb[0].mxu0
    %v248 = vpop.f32.mrb[0].mxu0
    %249 = vdwg.mxu0
    %vm250 = vcmp.gt.f32.partialorder %v244, 0.0
    %vm251 = vcmp.gt.f32.partialorder %v246, 0.0
    %v252 = vmul.f32 %v244, 1.442695
    %v253 = vpow.pop %v252
    %v254 = vmul.f32 %v246, 1.442695
    %v255 = vpow.pop %v254
    %v256 = vsub.f32 %v253, 1.0
    %v257 = vsub.f32 %v255, 1.0
    %v258 = vsel %vm250, %v244, %v256
    %v259 = vsel %vm251, %v246, %v257
    %v260 = vpack.c.bf16 %v258, %v258
    %v261 = vpack.c.bf16 %v259, %v259
    %v262 = vld [vmem:[#allocation5] sm:$0xff]
    %v263 = vld [vmem:[#allocation5 + $0x8] sm:$0xff]
    %v264 = vld [vmem:[#allocation5 + $0x10] sm:$0xff]
    %v265 = vld [vmem:[#allocation5 + $0x18] sm:$0xff]
    %v266 = vld [vmem:[#allocation5 + $0x20] sm:$0xff]
    %v267 = vld [vmem:[#allocation5 + $0x28] sm:$0xff]
    %v268 = vld [vmem:[#allocation5 + $0x30] sm:$0xff]
    %v269 = vld [vmem:[#allocation5 + $0x38] sm:$0xff]
    %v270 = vld [vmem:[#allocation5 + $0x40] sm:$0xff]
    %v271 = vld [vmem:[#allocation5 + $0x48] sm:$0xff]
    %v272 = vld [vmem:[#allocation5 + $0x50] sm:$0xff]
    %v273 = vld [vmem:[#allocation5 + $0x58] sm:$0xff]
    %v274 = vld [vmem:[#allocation5 + $0x60] sm:$0xff]
    %v275 = vld [vmem:[#allocation5 + $0x68] sm:$0xff]
    %v276 = vld [vmem:[#allocation5 + $0x70] sm:$0xff]
    %v277 = vld [vmem:[#allocation5 + $0x78] sm:$0xff]
    %v278 = vld [vmem:[#allocation5 + $0x80] sm:$0xff]
    %v279 = vld [vmem:[#allocation5 + $0x88] sm:$0xff]
    %v280 = vld [vmem:[#allocation5 + $0x90] sm:$0xff]
    %v281 = vld [vmem:[#allocation5 + $0x98] sm:$0xff]
    %v282 = vld [vmem:[#allocation5 + $0xa0] sm:$0xff]
    %v283 = vld [vmem:[#allocation5 + $0xa8] sm:$0xff]
    %v284 = vld [vmem:[#allocation5 + $0xb0] sm:$0xff]
    %v285 = vld [vmem:[#allocation5 + $0xb8] sm:$0xff]
    %v286 = vld [vmem:[#allocation5 + $0xc0] sm:$0xff]
    %v287 = vld [vmem:[#allocation5 + $0xc8] sm:$0xff]
    %v288 = vld [vmem:[#allocation5 + $0xd0] sm:$0xff]
    %v289 = vld [vmem:[#allocation5 + $0xd8] sm:$0xff]
    %v290 = vld [vmem:[#allocation5 + $0xe0] sm:$0xff]
    %v291 = vld [vmem:[#allocation5 + $0xe8] sm:$0xff]
    %v292 = vld [vmem:[#allocation5 + $0xf0] sm:$0xff]
    %v293 = vld [vmem:[#allocation5 + $0xf8] sm:$0xff]
    %v294 = vld [vmem:[%s5] sm:$0x3]
    %v296 = vlaneseq
    %v297 = vshrl.u32 %v296, 7
    %v298 = vsub.s32 0, %v297
    %v299 = vrot.slane %v294, %v298
    %v300 = vlaneseq
    %v301 = vshrl.u32 %v300, 7
    %v302 = vsub.s32 1, %v301
    %v303 = vrot.slane %v294, %v302
    %v338 = vunpack.c.l.b16 %v262
    %v339 = vunpack.c.h.b16 %v262
    %v340 = vunpack.c.l.b16 %v263
    %v341 = vunpack.c.h.b16 %v263
    %v342 = vunpack.c.l.b16 %v264
    %v343 = vunpack.c.h.b16 %v264
    %v344 = vunpack.c.l.b16 %v265
    %v345 = vunpack.c.h.b16 %v265
    %v346 = vunpack.c.l.b16 %v266
    %v347 = vunpack.c.h.b16 %v266
    %v348 = vunpack.c.l.b16 %v267
    %v349 = vunpack.c.h.b16 %v267
    %v350 = vunpack.c.l.b16 %v268
    %v351 = vunpack.c.h.b16 %v268
    %v352 = vunpack.c.l.b16 %v269
    %v353 = vunpack.c.h.b16 %v269
    %v354 = vunpack.c.l.b16 %v270
    %v355 = vunpack.c.h.b16 %v270
    %v356 = vunpack.c.l.b16 %v271
    %v357 = vunpack.c.h.b16 %v271
    %v358 = vunpack.c.l.b16 %v272
    %v359 = vunpack.c.h.b16 %v272
    %v360 = vunpack.c.l.b16 %v273
    %v361 = vunpack.c.h.b16 %v273
    %v362 = vunpack.c.l.b16 %v274
    %v363 = vunpack.c.h.b16 %v274
    %v364 = vunpack.c.l.b16 %v275
    %v365 = vunpack.c.h.b16 %v275
    %v366 = vunpack.c.l.b16 %v276
    %v367 = vunpack.c.h.b16 %v276
    %v368 = vunpack.c.l.b16 %v277
    %v369 = vunpack.c.h.b16 %v277
    %v370 = vunpack.c.l.b16 %v278
    %v371 = vunpack.c.h.b16 %v278
    %v372 = vunpack.c.l.b16 %v279
    %v373 = vunpack.c.h.b16 %v279
    %v374 = vunpack.c.l.b16 %v280
    %v375 = vunpack.c.h.b16 %v280
    %v376 = vunpack.c.l.b16 %v281
    %v377 = vunpack.c.h.b16 %v281
    %v378 = vunpack.c.l.b16 %v282
    %v379 = vunpack.c.h.b16 %v282
    %v380 = vunpack.c.l.b16 %v283
    %v381 = vunpack.c.h.b16 %v283
    %v382 = vunpack.c.l.b16 %v284
    %v383 = vunpack.c.h.b16 %v284
    %v384 = vunpack.c.l.b16 %v285
    %v385 = vunpack.c.h.b16 %v285
    %v386 = vunpack.c.l.b16 %v286
    %v387 = vunpack.c.h.b16 %v286
    %v388 = vunpack.c.l.b16 %v287
    %v389 = vunpack.c.h.b16 %v287
    %v390 = vunpack.c.l.b16 %v288
    %v391 = vunpack.c.h.b16 %v288
    %v392 = vunpack.c.l.b16 %v289
    %v393 = vunpack.c.h.b16 %v289
    %v394 = vunpack.c.l.b16 %v290
    %v395 = vunpack.c.h.b16 %v290
    %v396 = vunpack.c.l.b16 %v291
    %v397 = vunpack.c.h.b16 %v291
    %v398 = vunpack.c.l.b16 %v292
    %v399 = vunpack.c.h.b16 %v292
    %v400 = vunpack.c.l.b16 %v293
    %v401 = vunpack.c.h.b16 %v293
    %v402 = vpack.c.b16 %v340, %v338
    %v403 = vpack.c.b16 %v341, %v339
    %v404 = vpack.c.b16 %v344, %v342
    %v405 = vpack.c.b16 %v345, %v343
    %v406 = vpack.c.b16 %v348, %v346
    %v407 = vpack.c.b16 %v349, %v347
    %v408 = vpack.c.b16 %v352, %v350
    %v409 = vpack.c.b16 %v353, %v351
    %v410 = vpack.c.b16 %v356, %v354
    %v411 = vpack.c.b16 %v357, %v355
    %v412 = vpack.c.b16 %v360, %v358
    %v413 = vpack.c.b16 %v361, %v359
    %v414 = vpack.c.b16 %v364, %v362
    %v415 = vpack.c.b16 %v365, %v363
    %v416 = vpack.c.b16 %v368, %v366
    %v417 = vpack.c.b16 %v369, %v367
    %v418 = vpack.c.b16 %v372, %v370
    %v419 = vpack.c.b16 %v373, %v371
    %v420 = vpack.c.b16 %v376, %v374
    %v421 = vpack.c.b16 %v377, %v375
    %v422 = vpack.c.b16 %v380, %v378
    %v423 = vpack.c.b16 %v381, %v379
    %v424 = vpack.c.b16 %v384, %v382
    %v425 = vpack.c.b16 %v385, %v383
    %v426 = vpack.c.b16 %v388, %v386
    %v427 = vpack.c.b16 %v389, %v387
    %v428 = vpack.c.b16 %v392, %v390
    %v429 = vpack.c.b16 %v393, %v391
    %v430 = vpack.c.b16 %v396, %v394
    %v431 = vpack.c.b16 %v397, %v395
    %v432 = vpack.c.b16 %v400, %v398
    %v433 = vpack.c.b16 %v401, %v399
    %466 = vmatprep.subr.bf16.mxu0 %v403
    %467 = vmatpush1.bf16.msra.mxu0 %v402
    %468 = vmatprep.subr.bf16.mxu0 %v405
    %469 = vmatpush1.bf16.msra.mxu0 %v404
    %470 = vmatprep.subr.bf16.mxu0 %v407
    %471 = vmatpush1.bf16.msra.mxu0 %v406
    %472 = vmatprep.subr.bf16.mxu0 %v409
    %473 = vmatpush1.bf16.msra.mxu0 %v408
    %474 = vmatprep.subr.bf16.mxu0 %v411
    %475 = vmatpush1.bf16.msra.mxu0 %v410
    %476 = vmatprep.subr.bf16.mxu0 %v413
    %477 = vmatpush1.bf16.msra.mxu0 %v412
    %478 = vmatprep.subr.bf16.mxu0 %v415
    %479 = vmatpush1.bf16.msra.mxu0 %v414
    %480 = vmatprep.subr.bf16.mxu0 %v417
    %481 = vmatpush1.bf16.msra.mxu0 %v416
    %482 = vmatprep.subr.bf16.mxu0 %v419
    %483 = vmatpush1.bf16.msra.mxu0 %v418
    %484 = vmatprep.subr.bf16.mxu0 %v421
    %485 = vmatpush1.bf16.msra.mxu0 %v420
    %486 = vmatprep.subr.bf16.mxu0 %v423
    %487 = vmatpush1.bf16.msra.mxu0 %v422
    %488 = vmatprep.subr.bf16.mxu0 %v425
    %489 = vmatpush1.bf16.msra.mxu0 %v424
    %490 = vmatprep.subr.bf16.mxu0 %v427
    %491 = vmatpush1.bf16.msra.mxu0 %v426
    %492 = vmatprep.subr.bf16.mxu0 %v429
    %493 = vmatpush1.bf16.msra.mxu0 %v428
    %494 = vmatprep.subr.bf16.mxu0 %v431
    %495 = vmatpush1.bf16.msra.mxu0 %v430
    %496 = vmatprep.subr.bf16.mxu0 %v433
    %497 = vmatpush1.bf16.msra.mxu0 %v432
    %498 = vmatprep.mubr.bf16.mxu0 %v261
    %499 = vmatmul.mubr.bf16.gmra.mrb[0].mxu0 %v260
    %v500 = vpop.f32.mrb[0].mxu0
    %v501 = vadd.f32 %v299, %v500
    %v502 = vpop.f32.mrb[0].mxu0
    %v503 = vadd.f32 %v303, %v502
    %v504 = vpop.f32.mrb[0].mxu0
    %v505 = vpop.f32.mrb[0].mxu0
    %506 = vdwg.mxu0
    %vm507 = vcmp.gt.f32.partialorder %v501, 0.0
    %vm508 = vcmp.gt.f32.partialorder %v503, 0.0
    %v509 = vmul.f32 %v501, 1.442695
    %v510 = vpow.pop %v509
    %v511 = vmul.f32 %v503, 1.442695
    %v512 = vpow.pop %v511
    %v513 = vsub.f32 %v510, 1.0
    %v514 = vsub.f32 %v512, 1.0
    %v515 = vsel %vm507, %v501, %v513
    %v516 = vsel %vm508, %v503, %v514
    %v517 = vpack.c.bf16 %v515, %v515
    %v518 = vpack.c.bf16 %v516, %v516
    %v519 = vld [vmem:[#allocation7] sm:$0xff]
    %v520 = vld [vmem:[#allocation7 + $0x8] sm:$0xff]
    %v521 = vld [vmem:[#allocation7 + $0x10] sm:$0xff]
    %v522 = vld [vmem:[#allocation7 + $0x18] sm:$0xff]
    %v523 = vld [vmem:[#allocation7 + $0x20] sm:$0xff]
    %v524 = vld [vmem:[#allocation7 + $0x28] sm:$0xff]
    %v525 = vld [vmem:[#allocation7 + $0x30] sm:$0xff]
    %v526 = vld [vmem:[#allocation7 + $0x38] sm:$0xff]
    %v527 = vld [vmem:[#allocation7 + $0x40] sm:$0xff]
    %v528 = vld [vmem:[#allocation7 + $0x48] sm:$0xff]
    %v529 = vld [vmem:[#allocation7 + $0x50] sm:$0xff]
    %v530 = vld [vmem:[#allocation7 + $0x58] sm:$0xff]
    %v531 = vld [vmem:[#allocation7 + $0x60] sm:$0xff]
    %v532 = vld [vmem:[#allocation7 + $0x68] sm:$0xff]
    %v533 = vld [vmem:[#allocation7 + $0x70] sm:$0xff]
    %v534 = vld [vmem:[#allocation7 + $0x78] sm:$0xff]
    %v535 = vld [vmem:[#allocation7 + $0x80] sm:$0xff]
    %v536 = vld [vmem:[#allocation7 + $0x88] sm:$0xff]
    %v537 = vld [vmem:[#allocation7 + $0x90] sm:$0xff]
    %v538 = vld [vmem:[#allocation7 + $0x98] sm:$0xff]
    %v539 = vld [vmem:[#allocation7 + $0xa0] sm:$0xff]
    %v540 = vld [vmem:[#allocation7 + $0xa8] sm:$0xff]
    %v541 = vld [vmem:[#allocation7 + $0xb0] sm:$0xff]
    %v542 = vld [vmem:[#allocation7 + $0xb8] sm:$0xff]
    %v543 = vld [vmem:[#allocation7 + $0xc0] sm:$0xff]
    %v544 = vld [vmem:[#allocation7 + $0xc8] sm:$0xff]
    %v545 = vld [vmem:[#allocation7 + $0xd0] sm:$0xff]
    %v546 = vld [vmem:[#allocation7 + $0xd8] sm:$0xff]
    %v547 = vld [vmem:[#allocation7 + $0xe0] sm:$0xff]
    %v548 = vld [vmem:[#allocation7 + $0xe8] sm:$0xff]
    %v549 = vld [vmem:[#allocation7 + $0xf0] sm:$0xff]
    %v550 = vld [vmem:[#allocation7 + $0xf8] sm:$0xff]
    %v551 = vld [vmem:[%s7] sm:$0x3]
    %v553 = vlaneseq
    %v554 = vshrl.u32 %v553, 7
    %v555 = vsub.s32 0, %v554
    %v556 = vrot.slane %v551, %v555
    %v557 = vlaneseq
    %v558 = vshrl.u32 %v557, 7
    %v559 = vsub.s32 1, %v558
    %v560 = vrot.slane %v551, %v559
    %v595 = vunpack.c.l.b16 %v519
    %v596 = vunpack.c.h.b16 %v519
    %v597 = vunpack.c.l.b16 %v520
    %v598 = vunpack.c.h.b16 %v520
    %v599 = vunpack.c.l.b16 %v521
    %v600 = vunpack.c.h.b16 %v521
    %v601 = vunpack.c.l.b16 %v522
    %v602 = vunpack.c.h.b16 %v522
    %v603 = vunpack.c.l.b16 %v523
    %v604 = vunpack.c.h.b16 %v523
    %v605 = vunpack.c.l.b16 %v524
    %v606 = vunpack.c.h.b16 %v524
    %v607 = vunpack.c.l.b16 %v525
    %v608 = vunpack.c.h.b16 %v525
    %v609 = vunpack.c.l.b16 %v526
    %v610 = vunpack.c.h.b16 %v526
    %v611 = vunpack.c.l.b16 %v527
    %v612 = vunpack.c.h.b16 %v527
    %v613 = vunpack.c.l.b16 %v528
    %v614 = vunpack.c.h.b16 %v528
    %v615 = vunpack.c.l.b16 %v529
    %v616 = vunpack.c.h.b16 %v529
    %v617 = vunpack.c.l.b16 %v530
    %v618 = vunpack.c.h.b16 %v530
    %v619 = vunpack.c.l.b16 %v531
    %v620 = vunpack.c.h.b16 %v531
    %v621 = vunpack.c.l.b16 %v532
    %v622 = vunpack.c.h.b16 %v532
    %v623 = vunpack.c.l.b16 %v533
    %v624 = vunpack.c.h.b16 %v533
    %v625 = vunpack.c.l.b16 %v534
    %v626 = vunpack.c.h.b16 %v534
    %v627 = vunpack.c.l.b16 %v535
    %v628 = vunpack.c.h.b16 %v535
    %v629 = vunpack.c.l.b16 %v536
    %v630 = vunpack.c.h.b16 %v536
    %v631 = vunpack.c.l.b16 %v537
    %v632 = vunpack.c.h.b16 %v537
    %v633 = vunpack.c.l.b16 %v538
    %v634 = vunpack.c.h.b16 %v538
    %v635 = vunpack.c.l.b16 %v539
    %v636 = vunpack.c.h.b16 %v539
    %v637 = vunpack.c.l.b16 %v540
    %v638 = vunpack.c.h.b16 %v540
    %v639 = vunpack.c.l.b16 %v541
    %v640 = vunpack.c.h.b16 %v541
    %v641 = vunpack.c.l.b16 %v542
    %v642 = vunpack.c.h.b16 %v542
    %v643 = vunpack.c.l.b16 %v543
    %v644 = vunpack.c.h.b16 %v543
    %v645 = vunpack.c.l.b16 %v544
    %v646 = vunpack.c.h.b16 %v544
    %v647 = vunpack.c.l.b16 %v545
    %v648 = vunpack.c.h.b16 %v545
    %v649 = vunpack.c.l.b16 %v546
    %v650 = vunpack.c.h.b16 %v546
    %v651 = vunpack.c.l.b16 %v547
    %v652 = vunpack.c.h.b16 %v547
    %v653 = vunpack.c.l.b16 %v548
    %v654 = vunpack.c.h.b16 %v548
    %v655 = vunpack.c.l.b16 %v549
    %v656 = vunpack.c.h.b16 %v549
    %v657 = vunpack.c.l.b16 %v550
    %v658 = vunpack.c.h.b16 %v550
    %v659 = vpack.c.b16 %v597, %v595
    %v660 = vpack.c.b16 %v598, %v596
    %v661 = vpack.c.b16 %v601, %v599
    %v662 = vpack.c.b16 %v602, %v600
    %v663 = vpack.c.b16 %v605, %v603
    %v664 = vpack.c.b16 %v606, %v604
    %v665 = vpack.c.b16 %v609, %v607
    %v666 = vpack.c.b16 %v610, %v608
    %v667 = vpack.c.b16 %v613, %v611
    %v668 = vpack.c.b16 %v614, %v612
    %v669 = vpack.c.b16 %v617, %v615
    %v670 = vpack.c.b16 %v618, %v616
    %v671 = vpack.c.b16 %v621, %v619
    %v672 = vpack.c.b16 %v622, %v620
    %v673 = vpack.c.b16 %v625, %v623
    %v674 = vpack.c.b16 %v626, %v624
    %v675 = vpack.c.b16 %v629, %v627
    %v676 = vpack.c.b16 %v630, %v628
    %v677 = vpack.c.b16 %v633, %v631
    %v678 = vpack.c.b16 %v634, %v632
    %v679 = vpack.c.b16 %v637, %v635
    %v680 = vpack.c.b16 %v638, %v636
    %v681 = vpack.c.b16 %v641, %v639
    %v682 = vpack.c.b16 %v642, %v640
    %v683 = vpack.c.b16 %v645, %v643
    %v684 = vpack.c.b16 %v646, %v644
    %v685 = vpack.c.b16 %v649, %v647
    %v686 = vpack.c.b16 %v650, %v648
    %v687 = vpack.c.b16 %v653, %v651
    %v688 = vpack.c.b16 %v654, %v652
    %v689 = vpack.c.b16 %v657, %v655
    %v690 = vpack.c.b16 %v658, %v656
    %723 = vmatprep.subr.bf16.mxu0 %v660
    %724 = vmatpush1.bf16.msra.mxu0 %v659
    %725 = vmatprep.subr.bf16.mxu0 %v662
    %726 = vmatpush1.bf16.msra.mxu0 %v661
    %727 = vmatprep.subr.bf16.mxu0 %v664
    %728 = vmatpush1.bf16.msra.mxu0 %v663
    %729 = vmatprep.subr.bf16.mxu0 %v666
    %730 = vmatpush1.bf16.msra.mxu0 %v665
    %731 = vmatprep.subr.bf16.mxu0 %v668
    %732 = vmatpush1.bf16.msra.mxu0 %v667
    %733 = vmatprep.subr.bf16.mxu0 %v670
    %734 = vmatpush1.bf16.msra.mxu0 %v669
    %735 = vmatprep.subr.bf16.mxu0 %v672
    %736 = vmatpush1.bf16.msra.mxu0 %v671
    %737 = vmatprep.subr.bf16.mxu0 %v674
    %738 = vmatpush1.bf16.msra.mxu0 %v673
    %739 = vmatprep.subr.bf16.mxu0 %v676
    %740 = vmatpush1.bf16.msra.mxu0 %v675
    %741 = vmatprep.subr.bf16.mxu0 %v678
    %742 = vmatpush1.bf16.msra.mxu0 %v677
    %743 = vmatprep.subr.bf16.mxu0 %v680
    %744 = vmatpush1.bf16.msra.mxu0 %v679
    %745 = vmatprep.subr.bf16.mxu0 %v682
    %746 = vmatpush1.bf16.msra.mxu0 %v681
    %747 = vmatprep.subr.bf16.mxu0 %v684
    %748 = vmatpush1.bf16.msra.mxu0 %v683
    %749 = vmatprep.subr.bf16.mxu0 %v686
    %750 = vmatpush1.bf16.msra.mxu0 %v685
    %751 = vmatprep.subr.bf16.mxu0 %v688
    %752 = vmatpush1.bf16.msra.mxu0 %v687
    %753 = vmatprep.subr.bf16.mxu0 %v690
    %754 = vmatpush1.bf16.msra.mxu0 %v689
    %755 = vmatprep.mubr.bf16.mxu0 %v518
    %756 = vmatmul.mubr.bf16.gmra.mrb[0].mxu0 %v517
    %v757 = vpop.f32.mrb[0].mxu0
    %v758 = vadd.f32 %v556, %v757
    %v759 = vpop.f32.mrb[0].mxu0
    %v760 = vadd.f32 %v560, %v759
    %v761 = vpop.f32.mrb[0].mxu0
    %v762 = vpop.f32.mrb[0].mxu0
    %763 = vdwg.mxu0
    %vm764 = vcmp.gt.f32.partialorder %v758, 0.0
    %vm765 = vcmp.gt.f32.partialorder %v760, 0.0
    %v766 = vmul.f32 %v758, 1.442695
    %v767 = vpow.pop %v766
    %v768 = vmul.f32 %v760, 1.442695
    %v769 = vpow.pop %v768
    %v770 = vsub.f32 %v767, 1.0
    %v771 = vsub.f32 %v769, 1.0
    %v772 = vsel %vm764, %v758, %v770
    %v773 = vsel %vm765, %v760, %v771
    %v774 = vpack.c.bf16 %v772, %v772
    %v775 = vpack.c.bf16 %v773, %v773
    %v776 = vld [vmem:[#allocation8] sm:$0xff]
    %v777 = vld [vmem:[#allocation8 + $0x8] sm:$0xff]
    %v778 = vld [vmem:[#allocation8 + $0x10] sm:$0xff]
    %v779 = vld [vmem:[#allocation8 + $0x18] sm:$0xff]
    %v780 = vld [vmem:[#allocation8 + $0x20] sm:$0xff]
    %v781 = vld [vmem:[#allocation8 + $0x28] sm:$0xff]
    %v782 = vld [vmem:[#allocation8 + $0x30] sm:$0xff]
    %v783 = vld [vmem:[#allocation8 + $0x38] sm:$0xff]
    %v784 = vld [vmem:[#allocation8 + $0x40] sm:$0xff]
    %v785 = vld [vmem:[#allocation8 + $0x48] sm:$0xff]
    %v786 = vld [vmem:[#allocation8 + $0x50] sm:$0xff]
    %v787 = vld [vmem:[#allocation8 + $0x58] sm:$0xff]
    %v788 = vld [vmem:[#allocation8 + $0x60] sm:$0xff]
    %v789 = vld [vmem:[#allocation8 + $0x68] sm:$0xff]
    %v790 = vld [vmem:[#allocation8 + $0x70] sm:$0xff]
    %v791 = vld [vmem:[#allocation8 + $0x78] sm:$0xff]
    %v792 = vld [vmem:[#allocation8 + $0x80] sm:$0xff]
    %v793 = vld [vmem:[#allocation8 + $0x88] sm:$0xff]
    %v794 = vld [vmem:[#allocation8 + $0x90] sm:$0xff]
    %v795 = vld [vmem:[#allocation8 + $0x98] sm:$0xff]
    %v796 = vld [vmem:[#allocation8 + $0xa0] sm:$0xff]
    %v797 = vld [vmem:[#allocation8 + $0xa8] sm:$0xff]
    %v798 = vld [vmem:[#allocation8 + $0xb0] sm:$0xff]
    %v799 = vld [vmem:[#allocation8 + $0xb8] sm:$0xff]
    %v800 = vld [vmem:[#allocation8 + $0xc0] sm:$0xff]
    %v801 = vld [vmem:[#allocation8 + $0xc8] sm:$0xff]
    %v802 = vld [vmem:[#allocation8 + $0xd0] sm:$0xff]
    %v803 = vld [vmem:[#allocation8 + $0xd8] sm:$0xff]
    %v804 = vld [vmem:[#allocation8 + $0xe0] sm:$0xff]
    %v805 = vld [vmem:[#allocation8 + $0xe8] sm:$0xff]
    %v806 = vld [vmem:[#allocation8 + $0xf0] sm:$0xff]
    %v807 = vld [vmem:[#allocation8 + $0xf8] sm:$0xff]
    %v808 = vld [vmem:[#allocation8 + $0x100] sm:$0xff]
    %v809 = vld [vmem:[#allocation8 + $0x108] sm:$0xff]
    %v810 = vld [vmem:[#allocation8 + $0x110] sm:$0xff]
    %v811 = vld [vmem:[#allocation8 + $0x118] sm:$0xff]
    %v812 = vld [vmem:[#allocation8 + $0x120] sm:$0xff]
    %v813 = vld [vmem:[#allocation8 + $0x128] sm:$0xff]
    %v814 = vld [vmem:[#allocation8 + $0x130] sm:$0xff]
    %v815 = vld [vmem:[#allocation8 + $0x138] sm:$0xff]
    %v816 = vld [vmem:[#allocation8 + $0x140] sm:$0xff]
    %v817 = vld [vmem:[#allocation8 + $0x148] sm:$0xff]
    %v818 = vld [vmem:[#allocation8 + $0x150] sm:$0xff]
    %v819 = vld [vmem:[#allocation8 + $0x158] sm:$0xff]
    %v820 = vld [vmem:[#allocation8 + $0x160] sm:$0xff]
    %v821 = vld [vmem:[#allocation8 + $0x168] sm:$0xff]
    %v822 = vld [vmem:[#allocation8 + $0x170] sm:$0xff]
    %v823 = vld [vmem:[#allocation8 + $0x178] sm:$0xff]
    %v824 = vld [vmem:[#allocation8 + $0x180] sm:$0xff]
    %v825 = vld [vmem:[#allocation8 + $0x188] sm:$0xff]
    %v826 = vld [vmem:[#allocation8 + $0x190] sm:$0xff]
    %v827 = vld [vmem:[#allocation8 + $0x198] sm:$0xff]
    %v828 = vld [vmem:[#allocation8 + $0x1a0] sm:$0xff]
    %v829 = vld [vmem:[#allocation8 + $0x1a8] sm:$0xff]
    %v830 = vld [vmem:[#allocation8 + $0x1b0] sm:$0xff]
    %v831 = vld [vmem:[#allocation8 + $0x1b8] sm:$0xff]
    %v832 = vld [vmem:[#allocation8 + $0x1c0] sm:$0xff]
    %v833 = vld [vmem:[#allocation8 + $0x1c8] sm:$0xff]
    %v834 = vld [vmem:[#allocation8 + $0x1d0] sm:$0xff]
    %v835 = vld [vmem:[#allocation8 + $0x1d8] sm:$0xff]
    %v836 = vld [vmem:[#allocation8 + $0x1e0] sm:$0xff]
    %v837 = vld [vmem:[#allocation8 + $0x1e8] sm:$0xff]
    %v838 = vld [vmem:[#allocation8 + $0x1f0] sm:$0xff]
    %v839 = vld [vmem:[#allocation8 + $0x1f8] sm:$0xff]
    %v840 = vld [vmem:[%s9] sm:$0xf]
    %v842 = vlaneseq
    %v843 = vshrl.u32 %v842, 7
    %v844 = vsub.s32 0, %v843
    %v845 = vrot.slane %v840, %v844
    %v846 = vlaneseq
    %v847 = vshrl.u32 %v846, 7
    %v848 = vsub.s32 1, %v847
    %v849 = vrot.slane %v840, %v848
    %v850 = vlaneseq
    %v851 = vshrl.u32 %v850, 7
    %v852 = vsub.s32 2, %v851
    %v853 = vrot.slane %v840, %v852
    %v854 = vlaneseq
    %v855 = vshrl.u32 %v854, 7
    %v856 = vsub.s32 3, %v855
    %v857 = vrot.slane %v840, %v856
    %v926 = vunpack.c.l.b16 %v776
    %v927 = vunpack.c.h.b16 %v776
    %v928 = vunpack.c.l.b16 %v777
    %v929 = vunpack.c.h.b16 %v777
    %v930 = vunpack.c.l.b16 %v778
    %v931 = vunpack.c.h.b16 %v778
    %v932 = vunpack.c.l.b16 %v779
    %v933 = vunpack.c.h.b16 %v779
    %v934 = vunpack.c.l.b16 %v780
    %v935 = vunpack.c.h.b16 %v780
    %v936 = vunpack.c.l.b16 %v781
    %v937 = vunpack.c.h.b16 %v781
    %v938 = vunpack.c.l.b16 %v782
    %v939 = vunpack.c.h.b16 %v782
    %v940 = vunpack.c.l.b16 %v783
    %v941 = vunpack.c.h.b16 %v783
    %v942 = vunpack.c.l.b16 %v784
    %v943 = vunpack.c.h.b16 %v784
    %v944 = vunpack.c.l.b16 %v785
    %v945 = vunpack.c.h.b16 %v785
    %v946 = vunpack.c.l.b16 %v786
    %v947 = vunpack.c.h.b16 %v786
    %v948 = vunpack.c.l.b16 %v787
    %v949 = vunpack.c.h.b16 %v787
    %v950 = vunpack.c.l.b16 %v788
    %v951 = vunpack.c.h.b16 %v788
    %v952 = vunpack.c.l.b16 %v789
    %v953 = vunpack.c.h.b16 %v789
    %v954 = vunpack.c.l.b16 %v790
    %v955 = vunpack.c.h.b16 %v790
    %v956 = vunpack.c.l.b16 %v791
    %v957 = vunpack.c.h.b16 %v791
    %v958 = vunpack.c.l.b16 %v792
    %v959 = vunpack.c.h.b16 %v792
    %v960 = vunpack.c.l.b16 %v793
    %v961 = vunpack.c.h.b16 %v793
    %v962 = vunpack.c.l.b16 %v794
    %v963 = vunpack.c.h.b16 %v794
    %v964 = vunpack.c.l.b16 %v795
    %v965 = vunpack.c.h.b16 %v795
    %v966 = vunpack.c.l.b16 %v796
    %v967 = vunpack.c.h.b16 %v796
    %v968 = vunpack.c.l.b16 %v797
    %v969 = vunpack.c.h.b16 %v797
    %v970 = vunpack.c.l.b16 %v798
    %v971 = vunpack.c.h.b16 %v798
    %v972 = vunpack.c.l.b16 %v799
    %v973 = vunpack.c.h.b16 %v799
    %v974 = vunpack.c.l.b16 %v800
    %v975 = vunpack.c.h.b16 %v800
    %v976 = vunpack.c.l.b16 %v801
    %v977 = vunpack.c.h.b16 %v801
    %v978 = vunpack.c.l.b16 %v802
    %v979 = vunpack.c.h.b16 %v802
    %v980 = vunpack.c.l.b16 %v803
    %v981 = vunpack.c.h.b16 %v803
    %v982 = vunpack.c.l.b16 %v804
    %v983 = vunpack.c.h.b16 %v804
    %v984 = vunpack.c.l.b16 %v805
    %v985 = vunpack.c.h.b16 %v805
    %v986 = vunpack.c.l.b16 %v806
    %v987 = vunpack.c.h.b16 %v806
    %v988 = vunpack.c.l.b16 %v807
    %v989 = vunpack.c.h.b16 %v807
    %v990 = vunpack.c.l.b16 %v808
    %v991 = vunpack.c.h.b16 %v808
    %v992 = vunpack.c.l.b16 %v809
    %v993 = vunpack.c.h.b16 %v809
    %v994 = vunpack.c.l.b16 %v810
    %v995 = vunpack.c.h.b16 %v810
    %v996 = vunpack.c.l.b16 %v811
    %v997 = vunpack.c.h.b16 %v811
    %v998 = vunpack.c.l.b16 %v812
    %v999 = vunpack.c.h.b16 %v812
    %v1000 = vunpack.c.l.b16 %v813
    %v1001 = vunpack.c.h.b16 %v813
    %v1002 = vunpack.c.l.b16 %v814
    %v1003 = vunpack.c.h.b16 %v814
    %v1004 = vunpack.c.l.b16 %v815
    %v1005 = vunpack.c.h.b16 %v815
    %v1006 = vunpack.c.l.b16 %v816
    %v1007 = vunpack.c.h.b16 %v816
    %v1008 = vunpack.c.l.b16 %v817
    %v1009 = vunpack.c.h.b16 %v817
    %v1010 = vunpack.c.l.b16 %v818
    %v1011 = vunpack.c.h.b16 %v818
    %v1012 = vunpack.c.l.b16 %v819
    %v1013 = vunpack.c.h.b16 %v819
    %v1014 = vunpack.c.l.b16 %v820
    %v1015 = vunpack.c.h.b16 %v820
    %v1016 = vunpack.c.l.b16 %v821
    %v1017 = vunpack.c.h.b16 %v821
    %v1018 = vunpack.c.l.b16 %v822
    %v1019 = vunpack.c.h.b16 %v822
    %v1020 = vunpack.c.l.b16 %v823
    %v1021 = vunpack.c.h.b16 %v823
    %v1022 = vunpack.c.l.b16 %v824
    %v1023 = vunpack.c.h.b16 %v824
    %v1024 = vunpack.c.l.b16 %v825
    %v1025 = vunpack.c.h.b16 %v825
    %v1026 = vunpack.c.l.b16 %v826
    %v1027 = vunpack.c.h.b16 %v826
    %v1028 = vunpack.c.l.b16 %v827
    %v1029 = vunpack.c.h.b16 %v827
    %v1030 = vunpack.c.l.b16 %v828
    %v1031 = vunpack.c.h.b16 %v828
    %v1032 = vunpack.c.l.b16 %v829
    %v1033 = vunpack.c.h.b16 %v829
    %v1034 = vunpack.c.l.b16 %v830
    %v1035 = vunpack.c.h.b16 %v830
    %v1036 = vunpack.c.l.b16 %v831
    %v1037 = vunpack.c.h.b16 %v831
    %v1038 = vunpack.c.l.b16 %v832
    %v1039 = vunpack.c.h.b16 %v832
    %v1040 = vunpack.c.l.b16 %v833
    %v1041 = vunpack.c.h.b16 %v833
    %v1042 = vunpack.c.l.b16 %v834
    %v1043 = vunpack.c.h.b16 %v834
    %v1044 = vunpack.c.l.b16 %v835
    %v1045 = vunpack.c.h.b16 %v835
    %v1046 = vunpack.c.l.b16 %v836
    %v1047 = vunpack.c.h.b16 %v836
    %v1048 = vunpack.c.l.b16 %v837
    %v1049 = vunpack.c.h.b16 %v837
    %v1050 = vunpack.c.l.b16 %v838
    %v1051 = vunpack.c.h.b16 %v838
    %v1052 = vunpack.c.l.b16 %v839
    %v1053 = vunpack.c.h.b16 %v839
    %v1054 = vpack.c.b16 %v930, %v926
    %v1055 = vpack.c.b16 %v931, %v927
    %v1056 = vpack.c.b16 %v932, %v928
    %v1057 = vpack.c.b16 %v933, %v929
    %v1058 = vpack.c.b16 %v938, %v934
    %v1059 = vpack.c.b16 %v939, %v935
    %v1060 = vpack.c.b16 %v940, %v936
    %v1061 = vpack.c.b16 %v941, %v937
    %v1062 = vpack.c.b16 %v946, %v942
    %v1063 = vpack.c.b16 %v947, %v943
    %v1064 = vpack.c.b16 %v948, %v944
    %v1065 = vpack.c.b16 %v949, %v945
    %v1066 = vpack.c.b16 %v954, %v950
    %v1067 = vpack.c.b16 %v955, %v951
    %v1068 = vpack.c.b16 %v956, %v952
    %v1069 = vpack.c.b16 %v957, %v953
    %v1070 = vpack.c.b16 %v962, %v958
    %v1071 = vpack.c.b16 %v963, %v959
    %v1072 = vpack.c.b16 %v964, %v960
    %v1073 = vpack.c.b16 %v965, %v961
    %v1074 = vpack.c.b16 %v970, %v966
    %v1075 = vpack.c.b16 %v971, %v967
    %v1076 = vpack.c.b16 %v972, %v968
    %v1077 = vpack.c.b16 %v973, %v969
    %v1078 = vpack.c.b16 %v978, %v974
    %v1079 = vpack.c.b16 %v979, %v975
    %v1080 = vpack.c.b16 %v980, %v976
    %v1081 = vpack.c.b16 %v981, %v977
    %v1082 = vpack.c.b16 %v986, %v982
    %v1083 = vpack.c.b16 %v987, %v983
    %v1084 = vpack.c.b16 %v988, %v984
    %v1085 = vpack.c.b16 %v989, %v985
    %v1086 = vpack.c.b16 %v994, %v990
    %v1087 = vpack.c.b16 %v995, %v991
    %v1088 = vpack.c.b16 %v996, %v992
    %v1089 = vpack.c.b16 %v997, %v993
    %v1090 = vpack.c.b16 %v1002, %v998
    %v1091 = vpack.c.b16 %v1003, %v999
    %v1092 = vpack.c.b16 %v1004, %v1000
    %v1093 = vpack.c.b16 %v1005, %v1001
    %v1094 = vpack.c.b16 %v1010, %v1006
    %v1095 = vpack.c.b16 %v1011, %v1007
    %v1096 = vpack.c.b16 %v1012, %v1008
    %v1097 = vpack.c.b16 %v1013, %v1009
    %v1098 = vpack.c.b16 %v1018, %v1014
    %v1099 = vpack.c.b16 %v1019, %v1015
    %v1100 = vpack.c.b16 %v1020, %v1016
    %v1101 = vpack.c.b16 %v1021, %v1017
    %v1102 = vpack.c.b16 %v1026, %v1022
    %v1103 = vpack.c.b16 %v1027, %v1023
    %v1104 = vpack.c.b16 %v1028, %v1024
    %v1105 = vpack.c.b16 %v1029, %v1025
    %v1106 = vpack.c.b16 %v1034, %v1030
    %v1107 = vpack.c.b16 %v1035, %v1031
    %v1108 = vpack.c.b16 %v1036, %v1032
    %v1109 = vpack.c.b16 %v1037, %v1033
    %v1110 = vpack.c.b16 %v1042, %v1038
    %v1111 = vpack.c.b16 %v1043, %v1039
    %v1112 = vpack.c.b16 %v1044, %v1040
    %v1113 = vpack.c.b16 %v1045, %v1041
    %v1114 = vpack.c.b16 %v1050, %v1046
    %v1115 = vpack.c.b16 %v1051, %v1047
    %v1116 = vpack.c.b16 %v1052, %v1048
    %v1117 = vpack.c.b16 %v1053, %v1049
    %1182 = vmatprep.subr.bf16.mxu0 %v1055
    %1183 = vmatpush1.bf16.msra.mxu0 %v1054
    %1184 = vmatprep.subr.bf16.mxu0 %v1059
    %1185 = vmatpush1.bf16.msra.mxu0 %v1058
    %1186 = vmatprep.subr.bf16.mxu0 %v1063
    %1187 = vmatpush1.bf16.msra.mxu0 %v1062
    %1188 = vmatprep.subr.bf16.mxu0 %v1067
    %1189 = vmatpush1.bf16.msra.mxu0 %v1066
    %1190 = vmatprep.subr.bf16.mxu0 %v1071
    %1191 = vmatpush1.bf16.msra.mxu0 %v1070
    %1192 = vmatprep.subr.bf16.mxu0 %v1075
    %1193 = vmatpush1.bf16.msra.mxu0 %v1074
    %1194 = vmatprep.subr.bf16.mxu0 %v1079
    %1195 = vmatpush1.bf16.msra.mxu0 %v1078
    %1196 = vmatprep.subr.bf16.mxu0 %v1083
    %1197 = vmatpush1.bf16.msra.mxu0 %v1082
    %1198 = vmatprep.subr.bf16.mxu0 %v1087
    %1199 = vmatpush1.bf16.msra.mxu0 %v1086
    %1200 = vmatprep.subr.bf16.mxu0 %v1091
    %1201 = vmatpush1.bf16.msra.mxu0 %v1090
    %1202 = vmatprep.subr.bf16.mxu0 %v1095
    %1203 = vmatpush1.bf16.msra.mxu0 %v1094
    %1204 = vmatprep.subr.bf16.mxu0 %v1099
    %1205 = vmatpush1.bf16.msra.mxu0 %v1098
    %1206 = vmatprep.subr.bf16.mxu0 %v1103
    %1207 = vmatpush1.bf16.msra.mxu0 %v1102
    %1208 = vmatprep.subr.bf16.mxu0 %v1107
    %1209 = vmatpush1.bf16.msra.mxu0 %v1106
    %1210 = vmatprep.subr.bf16.mxu0 %v1111
    %1211 = vmatpush1.bf16.msra.mxu0 %v1110
    %1212 = vmatprep.subr.bf16.mxu0 %v1115
    %1213 = vmatpush1.bf16.msra.mxu0 %v1114
    %1214 = vmatprep.mubr.bf16.mxu0 %v775
    %1215 = vmatmul.mubr.bf16.gmra.mrb[0].mxu0 %v774
    %v1216 = vpop.f32.mrb[0].mxu0
    %v1217 = vadd.f32 %v845, %v1216
    %v1218 = vpop.f32.mrb[0].mxu0
    %v1219 = vadd.f32 %v849, %v1218
    %v1220 = vpop.f32.mrb[0].mxu0
    %v1221 = vpop.f32.mrb[0].mxu0
    %1222 = vdwg.mxu0
    %1223 = vmatprep.subr.bf16.mxu0 %v1057
    %1224 = vmatpush1.bf16.msra.mxu0 %v1056
    %1225 = vmatprep.subr.bf16.mxu0 %v1061
    %1226 = vmatpush1.bf16.msra.mxu0 %v1060
    %1227 = vmatprep.subr.bf16.mxu0 %v1065
    %1228 = vmatpush1.bf16.msra.mxu0 %v1064
    %1229 = vmatprep.subr.bf16.mxu0 %v1069
    %1230 = vmatpush1.bf16.msra.mxu0 %v1068
    %1231 = vmatprep.subr.bf16.mxu0 %v1073
    %1232 = vmatpush1.bf16.msra.mxu0 %v1072
    %1233 = vmatprep.subr.bf16.mxu0 %v1077
    %1234 = vmatpush1.bf16.msra.mxu0 %v1076
    %1235 = vmatprep.subr.bf16.mxu0 %v1081
    %1236 = vmatpush1.bf16.msra.mxu0 %v1080
    %1237 = vmatprep.subr.bf16.mxu0 %v1085
    %1238 = vmatpush1.bf16.msra.mxu0 %v1084
    %1239 = vmatprep.subr.bf16.mxu0 %v1089
    %1240 = vmatpush1.bf16.msra.mxu0 %v1088
    %1241 = vmatprep.subr.bf16.mxu0 %v1093
    %1242 = vmatpush1.bf16.msra.mxu0 %v1092
    %1243 = vmatprep.subr.bf16.mxu0 %v1097
    %1244 = vmatpush1.bf16.msra.mxu0 %v1096
    %1245 = vmatprep.subr.bf16.mxu0 %v1101
    %1246 = vmatpush1.bf16.msra.mxu0 %v1100
    %1247 = vmatprep.subr.bf16.mxu0 %v1105
    %1248 = vmatpush1.bf16.msra.mxu0 %v1104
    %1249 = vmatprep.subr.bf16.mxu0 %v1109
    %1250 = vmatpush1.bf16.msra.mxu0 %v1108
    %1251 = vmatprep.subr.bf16.mxu0 %v1113
    %1252 = vmatpush1.bf16.msra.mxu0 %v1112
    %1253 = vmatprep.subr.bf16.mxu0 %v1117
    %1254 = vmatpush1.bf16.msra.mxu0 %v1116
    %1255 = vmatprep.mubr.bf16.mxu0 %v775
    %1256 = vmatmul.mubr.bf16.gmra.mrb[0].mxu0 %v774
    %v1257 = vpop.f32.mrb[0].mxu0
    %v1258 = vadd.f32 %v853, %v1257
    %v1259 = vpop.f32.mrb[0].mxu0
    %v1260 = vadd.f32 %v857, %v1259
    %v1261 = vpop.f32.mrb[0].mxu0
    %v1262 = vpop.f32.mrb[0].mxu0
    %1263 = vdwg.mxu0
    %vm1264 = vcmp.gt.f32.partialorder %v1217, 0.0
    %vm1265 = vcmp.gt.f32.partialorder %v1219, 0.0
    %vm1266 = vcmp.gt.f32.partialorder %v1258, 0.0
    %vm1267 = vcmp.gt.f32.partialorder %v1260, 0.0
    %v1268 = vmul.f32 %v1217, 1.442695
    %v1269 = vpow.pop %v1268
    %v1270 = vmul.f32 %v1219, 1.442695
    %v1271 = vpow.pop %v1270
    %v1272 = vmul.f32 %v1258, 1.442695
    %v1273 = vpow.pop %v1272
    %v1274 = vmul.f32 %v1260, 1.442695
    %v1275 = vpow.pop %v1274
    %v1276 = vsub.f32 %v1269, 1.0
    %v1277 = vsub.f32 %v1271, 1.0
    %v1278 = vsub.f32 %v1273, 1.0
    %v1279 = vsub.f32 %v1275, 1.0
    %v1280 = vsel %vm1264, %v1217, %v1276
    %v1281 = vsel %vm1265, %v1219, %v1277
    %v1282 = vsel %vm1266, %v1258, %v1278
    %v1283 = vsel %vm1267, %v1260, %v1279
    %v1284 = vpack.c.bf16 %v1280, %v1280
    %v1285 = vpack.c.bf16 %v1281, %v1281
    %v1286 = vld [vmem:[#allocation10] sm:$0xff]
    %v1287 = vld [vmem:[#allocation10 + $0x8] sm:$0xff]
    %v1288 = vld [vmem:[#allocation10 + $0x10] sm:$0xff]
    %v1289 = vld [vmem:[#allocation10 + $0x18] sm:$0xff]
    %v1290 = vld [vmem:[#allocation10 + $0x20] sm:$0xff]
    %v1291 = vld [vmem:[#allocation10 + $0x28] sm:$0xff]
    %v1292 = vld [vmem:[#allocation10 + $0x30] sm:$0xff]
    %v1293 = vld [vmem:[#allocation10 + $0x38] sm:$0xff]
    %v1294 = vld [vmem:[#allocation10 + $0x40] sm:$0xff]
    %v1295 = vld [vmem:[#allocation10 + $0x48] sm:$0xff]
    %v1296 = vld [vmem:[#allocation10 + $0x50] sm:$0xff]
    %v1297 = vld [vmem:[#allocation10 + $0x58] sm:$0xff]
    %v1298 = vld [vmem:[#allocation10 + $0x60] sm:$0xff]
    %v1299 = vld [vmem:[#allocation10 + $0x68] sm:$0xff]
    %v1300 = vld [vmem:[#allocation10 + $0x70] sm:$0xff]
    %v1301 = vld [vmem:[#allocation10 + $0x78] sm:$0xff]
    %v1302 = vld [vmem:[#allocation10 + $0x80] sm:$0xff]
    %v1303 = vld [vmem:[#allocation10 + $0x88] sm:$0xff]
    %v1304 = vld [vmem:[#allocation10 + $0x90] sm:$0xff]
    %v1305 = vld [vmem:[#allocation10 + $0x98] sm:$0xff]
    %v1306 = vld [vmem:[#allocation10 + $0xa0] sm:$0xff]
    %v1307 = vld [vmem:[#allocation10 + $0xa8] sm:$0xff]
    %v1308 = vld [vmem:[#allocation10 + $0xb0] sm:$0xff]
    %v1309 = vld [vmem:[#allocation10 + $0xb8] sm:$0xff]
    %v1310 = vld [vmem:[#allocation10 + $0xc0] sm:$0xff]
    %v1311 = vld [vmem:[#allocation10 + $0xc8] sm:$0xff]
    %v1312 = vld [vmem:[#allocation10 + $0xd0] sm:$0xff]
    %v1313 = vld [vmem:[#allocation10 + $0xd8] sm:$0xff]
    %v1314 = vld [vmem:[#allocation10 + $0xe0] sm:$0xff]
    %v1315 = vld [vmem:[#allocation10 + $0xe8] sm:$0xff]
    %v1316 = vld [vmem:[#allocation10 + $0xf0] sm:$0xff]
    %v1317 = vld [vmem:[#allocation10 + $0xf8] sm:$0xff]
    %v1318 = vld [vmem:[%s11] sm:$0x3]
    %v1320 = vlaneseq
    %v1321 = vshrl.u32 %v1320, 7
    %v1322 = vsub.s32 0, %v1321
    %v1323 = vrot.slane %v1318, %v1322
    %v1324 = vlaneseq
    %v1325 = vshrl.u32 %v1324, 7
    %v1326 = vsub.s32 1, %v1325
    %v1327 = vrot.slane %v1318, %v1326
    %v1362 = vunpack.c.l.b16 %v1286
    %v1363 = vunpack.c.h.b16 %v1286
    %v1364 = vunpack.c.l.b16 %v1287
    %v1365 = vunpack.c.h.b16 %v1287
    %v1366 = vunpack.c.l.b16 %v1288
    %v1367 = vunpack.c.h.b16 %v1288
    %v1368 = vunpack.c.l.b16 %v1289
    %v1369 = vunpack.c.h.b16 %v1289
    %v1370 = vunpack.c.l.b16 %v1290
    %v1371 = vunpack.c.h.b16 %v1290
    %v1372 = vunpack.c.l.b16 %v1291
    %v1373 = vunpack.c.h.b16 %v1291
    %v1374 = vunpack.c.l.b16 %v1292
    %v1375 = vunpack.c.h.b16 %v1292
    %v1376 = vunpack.c.l.b16 %v1293
    %v1377 = vunpack.c.h.b16 %v1293
    %v1378 = vunpack.c.l.b16 %v1294
    %v1379 = vunpack.c.h.b16 %v1294
    %v1380 = vunpack.c.l.b16 %v1295
    %v1381 = vunpack.c.h.b16 %v1295
    %v1382 = vunpack.c.l.b16 %v1296
    %v1383 = vunpack.c.h.b16 %v1296
    %v1384 = vunpack.c.l.b16 %v1297
    %v1385 = vunpack.c.h.b16 %v1297
    %v1386 = vunpack.c.l.b16 %v1298
    %v1387 = vunpack.c.h.b16 %v1298
    %v1388 = vunpack.c.l.b16 %v1299
    %v1389 = vunpack.c.h.b16 %v1299
    %v1390 = vunpack.c.l.b16 %v1300
    %v1391 = vunpack.c.h.b16 %v1300
    %v1392 = vunpack.c.l.b16 %v1301
    %v1393 = vunpack.c.h.b16 %v1301
    %v1394 = vunpack.c.l.b16 %v1302
    %v1395 = vunpack.c.h.b16 %v1302
    %v1396 = vunpack.c.l.b16 %v1303
    %v1397 = vunpack.c.h.b16 %v1303
    %v1398 = vunpack.c.l.b16 %v1304
    %v1399 = vunpack.c.h.b16 %v1304
    %v1400 = vunpack.c.l.b16 %v1305
    %v1401 = vunpack.c.h.b16 %v1305
    %v1402 = vunpack.c.l.b16 %v1306
    %v1403 = vunpack.c.h.b16 %v1306
    %v1404 = vunpack.c.l.b16 %v1307
    %v1405 = vunpack.c.h.b16 %v1307
    %v1406 = vunpack.c.l.b16 %v1308
    %v1407 = vunpack.c.h.b16 %v1308
    %v1408 = vunpack.c.l.b16 %v1309
    %v1409 = vunpack.c.h.b16 %v1309
    %v1410 = vunpack.c.l.b16 %v1310
    %v1411 = vunpack.c.h.b16 %v1310
    %v1412 = vunpack.c.l.b16 %v1311
    %v1413 = vunpack.c.h.b16 %v1311
    %v1414 = vunpack.c.l.b16 %v1312
    %v1415 = vunpack.c.h.b16 %v1312
    %v1416 = vunpack.c.l.b16 %v1313
    %v1417 = vunpack.c.h.b16 %v1313
    %v1418 = vunpack.c.l.b16 %v1314
    %v1419 = vunpack.c.h.b16 %v1314
    %v1420 = vunpack.c.l.b16 %v1315
    %v1421 = vunpack.c.h.b16 %v1315
    %v1422 = vunpack.c.l.b16 %v1316
    %v1423 = vunpack.c.h.b16 %v1316
    %v1424 = vunpack.c.l.b16 %v1317
    %v1425 = vunpack.c.h.b16 %v1317
    %v1426 = vpack.c.b16 %v1364, %v1362
    %v1427 = vpack.c.b16 %v1365, %v1363
    %v1428 = vpack.c.b16 %v1368, %v1366
    %v1429 = vpack.c.b16 %v1369, %v1367
    %v1430 = vpack.c.b16 %v1372, %v1370
    %v1431 = vpack.c.b16 %v1373, %v1371
    %v1432 = vpack.c.b16 %v1376, %v1374
    %v1433 = vpack.c.b16 %v1377, %v1375
    %v1434 = vpack.c.b16 %v1380, %v1378
    %v1435 = vpack.c.b16 %v1381, %v1379
    %v1436 = vpack.c.b16 %v1384, %v1382
    %v1437 = vpack.c.b16 %v1385, %v1383
    %v1438 = vpack.c.b16 %v1388, %v1386
    %v1439 = vpack.c.b16 %v1389, %v1387
    %v1440 = vpack.c.b16 %v1392, %v1390
    %v1441 = vpack.c.b16 %v1393, %v1391
    %v1442 = vpack.c.b16 %v1396, %v1394
    %v1443 = vpack.c.b16 %v1397, %v1395
    %v1444 = vpack.c.b16 %v1400, %v1398
    %v1445 = vpack.c.b16 %v1401, %v1399
    %v1446 = vpack.c.b16 %v1404, %v1402
    %v1447 = vpack.c.b16 %v1405, %v1403
    %v1448 = vpack.c.b16 %v1408, %v1406
    %v1449 = vpack.c.b16 %v1409, %v1407
    %v1450 = vpack.c.b16 %v1412, %v1410
    %v1451 = vpack.c.b16 %v1413, %v1411
    %v1452 = vpack.c.b16 %v1416, %v1414
    %v1453 = vpack.c.b16 %v1417, %v1415
    %v1454 = vpack.c.b16 %v1420, %v1418
    %v1455 = vpack.c.b16 %v1421, %v1419
    %v1456 = vpack.c.b16 %v1424, %v1422
    %v1457 = vpack.c.b16 %v1425, %v1423
    %1490 = vmatprep.subr.bf16.mxu0 %v1427
    %1491 = vmatpush1.bf16.msra.mxu0 %v1426
    %1492 = vmatprep.subr.bf16.mxu0 %v1429
    %1493 = vmatpush1.bf16.msra.mxu0 %v1428
    %1494 = vmatprep.subr.bf16.mxu0 %v1431
    %1495 = vmatpush1.bf16.msra.mxu0 %v1430
    %1496 = vmatprep.subr.bf16.mxu0 %v1433
    %1497 = vmatpush1.bf16.msra.mxu0 %v1432
    %1498 = vmatprep.subr.bf16.mxu0 %v1435
    %1499 = vmatpush1.bf16.msra.mxu0 %v1434
    %1500 = vmatprep.subr.bf16.mxu0 %v1437
    %1501 = vmatpush1.bf16.msra.mxu0 %v1436
    %1502 = vmatprep.subr.bf16.mxu0 %v1439
    %1503 = vmatpush1.bf16.msra.mxu0 %v1438
    %1504 = vmatprep.subr.bf16.mxu0 %v1441
    %1505 = vmatpush1.bf16.msra.mxu0 %v1440
    %1506 = vmatprep.subr.bf16.mxu0 %v1443
    %1507 = vmatpush1.bf16.msra.mxu0 %v1442
    %1508 = vmatprep.subr.bf16.mxu0 %v1445
    %1509 = vmatpush1.bf16.msra.mxu0 %v1444
    %1510 = vmatprep.subr.bf16.mxu0 %v1447
    %1511 = vmatpush1.bf16.msra.mxu0 %v1446
    %1512 = vmatprep.subr.bf16.mxu0 %v1449
    %1513 = vmatpush1.bf16.msra.mxu0 %v1448
    %1514 = vmatprep.subr.bf16.mxu0 %v1451
    %1515 = vmatpush1.bf16.msra.mxu0 %v1450
    %1516 = vmatprep.subr.bf16.mxu0 %v1453
    %1517 = vmatpush1.bf16.msra.mxu0 %v1452
    %1518 = vmatprep.subr.bf16.mxu0 %v1455
    %1519 = vmatpush1.bf16.msra.mxu0 %v1454
    %1520 = vmatprep.subr.bf16.mxu0 %v1457
    %1521 = vmatpush1.bf16.msra.mxu0 %v1456
    %1522 = vmatprep.mubr.bf16.mxu0 %v1285
    %1523 = vmatmul.mubr.bf16.gmra.mrb[0].mxu0 %v1284
    %v1524 = vpop.f32.mrb[0].mxu0
    %v1525 = vadd.f32 %v1323, %v1524
    %v1526 = vpop.f32.mrb[0].mxu0
    %v1527 = vadd.f32 %v1327, %v1526
    %v1528 = vpop.f32.mrb[0].mxu0
    %v1529 = vpop.f32.mrb[0].mxu0
    %1530 = vdwg.mxu0
    %vm1531 = vcmp.gt.f32.partialorder %v1525, 0.0
    %vm1532 = vcmp.gt.f32.partialorder %v1527, 0.0
    %v1533 = vmul.f32 %v1525, 1.442695
    %v1534 = vpow.pop %v1533
    %v1535 = vmul.f32 %v1527, 1.442695
    %v1536 = vpow.pop %v1535
    %v1537 = vsub.f32 %v1534, 1.0
    %v1538 = vsub.f32 %v1536, 1.0
    %v1539 = vsel %vm1531, %v1525, %v1537
    %v1540 = vsel %vm1532, %v1527, %v1538
    %v1541 = vpack.c.bf16 %v1282, %v1282
    %v1542 = vpack.c.bf16 %v1283, %v1283
    %v1543 = vld [vmem:[#allocation11] sm:$0xff]
    %v1544 = vld [vmem:[#allocation11 + $0x8] sm:$0xff]
    %v1545 = vld [vmem:[#allocation11 + $0x10] sm:$0xff]
    %v1546 = vld [vmem:[#allocation11 + $0x18] sm:$0xff]
    %v1547 = vld [vmem:[#allocation11 + $0x20] sm:$0xff]
    %v1548 = vld [vmem:[#allocation11 + $0x28] sm:$0xff]
    %v1549 = vld [vmem:[#allocation11 + $0x30] sm:$0xff]
    %v1550 = vld [vmem:[#allocation11 + $0x38] sm:$0xff]
    %v1551 = vld [vmem:[#allocation11 + $0x40] sm:$0xff]
    %v1552 = vld [vmem:[#allocation11 + $0x48] sm:$0xff]
    %v1553 = vld [vmem:[#allocation11 + $0x50] sm:$0xff]
    %v1554 = vld [vmem:[#allocation11 + $0x58] sm:$0xff]
    %v1555 = vld [vmem:[#allocation11 + $0x60] sm:$0xff]
    %v1556 = vld [vmem:[#allocation11 + $0x68] sm:$0xff]
    %v1557 = vld [vmem:[#allocation11 + $0x70] sm:$0xff]
    %v1558 = vld [vmem:[#allocation11 + $0x78] sm:$0xff]
    %v1559 = vld [vmem:[#allocation11 + $0x80] sm:$0xff]
    %v1560 = vld [vmem:[#allocation11 + $0x88] sm:$0xff]
    %v1561 = vld [vmem:[#allocation11 + $0x90] sm:$0xff]
    %v1562 = vld [vmem:[#allocation11 + $0x98] sm:$0xff]
    %v1563 = vld [vmem:[#allocation11 + $0xa0] sm:$0xff]
    %v1564 = vld [vmem:[#allocation11 + $0xa8] sm:$0xff]
    %v1565 = vld [vmem:[#allocation11 + $0xb0] sm:$0xff]
    %v1566 = vld [vmem:[#allocation11 + $0xb8] sm:$0xff]
    %v1567 = vld [vmem:[#allocation11 + $0xc0] sm:$0xff]
    %v1568 = vld [vmem:[#allocation11 + $0xc8] sm:$0xff]
    %v1569 = vld [vmem:[#allocation11 + $0xd0] sm:$0xff]
    %v1570 = vld [vmem:[#allocation11 + $0xd8] sm:$0xff]
    %v1571 = vld [vmem:[#allocation11 + $0xe0] sm:$0xff]
    %v1572 = vld [vmem:[#allocation11 + $0xe8] sm:$0xff]
    %v1573 = vld [vmem:[#allocation11 + $0xf0] sm:$0xff]
    %v1574 = vld [vmem:[#allocation11 + $0xf8] sm:$0xff]
    %v1575 = vld [vmem:[%s13] sm:$0x3]
    %v1577 = vlaneseq
    %v1578 = vshrl.u32 %v1577, 7
    %v1579 = vsub.s32 0, %v1578
    %v1580 = vrot.slane %v1575, %v1579
    %v1581 = vlaneseq
    %v1582 = vshrl.u32 %v1581, 7
    %v1583 = vsub.s32 1, %v1582
    %v1584 = vrot.slane %v1575, %v1583
    %v1619 = vunpack.c.l.b16 %v1543
    %v1620 = vunpack.c.h.b16 %v1543
    %v1621 = vunpack.c.l.b16 %v1544
    %v1622 = vunpack.c.h.b16 %v1544
    %v1623 = vunpack.c.l.b16 %v1545
    %v1624 = vunpack.c.h.b16 %v1545
    %v1625 = vunpack.c.l.b16 %v1546
    %v1626 = vunpack.c.h.b16 %v1546
    %v1627 = vunpack.c.l.b16 %v1547
    %v1628 = vunpack.c.h.b16 %v1547
    %v1629 = vunpack.c.l.b16 %v1548
    %v1630 = vunpack.c.h.b16 %v1548
    %v1631 = vunpack.c.l.b16 %v1549
    %v1632 = vunpack.c.h.b16 %v1549
    %v1633 = vunpack.c.l.b16 %v1550
    %v1634 = vunpack.c.h.b16 %v1550
    %v1635 = vunpack.c.l.b16 %v1551
    %v1636 = vunpack.c.h.b16 %v1551
    %v1637 = vunpack.c.l.b16 %v1552
    %v1638 = vunpack.c.h.b16 %v1552
    %v1639 = vunpack.c.l.b16 %v1553
    %v1640 = vunpack.c.h.b16 %v1553
    %v1641 = vunpack.c.l.b16 %v1554
    %v1642 = vunpack.c.h.b16 %v1554
    %v1643 = vunpack.c.l.b16 %v1555
    %v1644 = vunpack.c.h.b16 %v1555
    %v1645 = vunpack.c.l.b16 %v1556
    %v1646 = vunpack.c.h.b16 %v1556
    %v1647 = vunpack.c.l.b16 %v1557
    %v1648 = vunpack.c.h.b16 %v1557
    %v1649 = vunpack.c.l.b16 %v1558
    %v1650 = vunpack.c.h.b16 %v1558
    %v1651 = vunpack.c.l.b16 %v1559
    %v1652 = vunpack.c.h.b16 %v1559
    %v1653 = vunpack.c.l.b16 %v1560
    %v1654 = vunpack.c.h.b16 %v1560
    %v1655 = vunpack.c.l.b16 %v1561
    %v1656 = vunpack.c.h.b16 %v1561
    %v1657 = vunpack.c.l.b16 %v1562
    %v1658 = vunpack.c.h.b16 %v1562
    %v1659 = vunpack.c.l.b16 %v1563
    %v1660 = vunpack.c.h.b16 %v1563
    %v1661 = vunpack.c.l.b16 %v1564
    %v1662 = vunpack.c.h.b16 %v1564
    %v1663 = vunpack.c.l.b16 %v1565
    %v1664 = vunpack.c.h.b16 %v1565
    %v1665 = vunpack.c.l.b16 %v1566
    %v1666 = vunpack.c.h.b16 %v1566
    %v1667 = vunpack.c.l.b16 %v1567
    %v1668 = vunpack.c.h.b16 %v1567
    %v1669 = vunpack.c.l.b16 %v1568
    %v1670 = vunpack.c.h.b16 %v1568
    %v1671 = vunpack.c.l.b16 %v1569
    %v1672 = vunpack.c.h.b16 %v1569
    %v1673 = vunpack.c.l.b16 %v1570
    %v1674 = vunpack.c.h.b16 %v1570
    %v1675 = vunpack.c.l.b16 %v1571
    %v1676 = vunpack.c.h.b16 %v1571
    %v1677 = vunpack.c.l.b16 %v1572
    %v1678 = vunpack.c.h.b16 %v1572
    %v1679 = vunpack.c.l.b16 %v1573
    %v1680 = vunpack.c.h.b16 %v1573
    %v1681 = vunpack.c.l.b16 %v1574
    %v1682 = vunpack.c.h.b16 %v1574
    %v1683 = vpack.c.b16 %v1621, %v1619
    %v1684 = vpack.c.b16 %v1622, %v1620
    %v1685 = vpack.c.b16 %v1625, %v1623
    %v1686 = vpack.c.b16 %v1626, %v1624
    %v1687 = vpack.c.b16 %v1629, %v1627
    %v1688 = vpack.c.b16 %v1630, %v1628
    %v1689 = vpack.c.b16 %v1633, %v1631
    %v1690 = vpack.c.b16 %v1634, %v1632
    %v1691 = vpack.c.b16 %v1637, %v1635
    %v1692 = vpack.c.b16 %v1638, %v1636
    %v1693 = vpack.c.b16 %v1641, %v1639
    %v1694 = vpack.c.b16 %v1642, %v1640
    %v1695 = vpack.c.b16 %v1645, %v1643
    %v1696 = vpack.c.b16 %v1646, %v1644
    %v1697 = vpack.c.b16 %v1649, %v1647
    %v1698 = vpack.c.b16 %v1650, %v1648
    %v1699 = vpack.c.b16 %v1653, %v1651
    %v1700 = vpack.c.b16 %v1654, %v1652
    %v1701 = vpack.c.b16 %v1657, %v1655
    %v1702 = vpack.c.b16 %v1658, %v1656
    %v1703 = vpack.c.b16 %v1661, %v1659
    %v1704 = vpack.c.b16 %v1662, %v1660
    %v1705 = vpack.c.b16 %v1665, %v1663
    %v1706 = vpack.c.b16 %v1666, %v1664
    %v1707 = vpack.c.b16 %v1669, %v1667
    %v1708 = vpack.c.b16 %v1670, %v1668
    %v1709 = vpack.c.b16 %v1673, %v1671
    %v1710 = vpack.c.b16 %v1674, %v1672
    %v1711 = vpack.c.b16 %v1677, %v1675
    %v1712 = vpack.c.b16 %v1678, %v1676
    %v1713 = vpack.c.b16 %v1681, %v1679
    %v1714 = vpack.c.b16 %v1682, %v1680
    %1747 = vmatprep.subr.bf16.mxu0 %v1684
    %1748 = vmatpush1.bf16.msra.mxu0 %v1683
    %1749 = vmatprep.subr.bf16.mxu0 %v1686
    %1750 = vmatpush1.bf16.msra.mxu0 %v1685
    %1751 = vmatprep.subr.bf16.mxu0 %v1688
    %1752 = vmatpush1.bf16.msra.mxu0 %v1687
    %1753 = vmatprep.subr.bf16.mxu0 %v1690
    %1754 = vmatpush1.bf16.msra.mxu0 %v1689
    %1755 = vmatprep.subr.bf16.mxu0 %v1692
    %1756 = vmatpush1.bf16.msra.mxu0 %v1691
    %1757 = vmatprep.subr.bf16.mxu0 %v1694
    %1758 = vmatpush1.bf16.msra.mxu0 %v1693
    %1759 = vmatprep.subr.bf16.mxu0 %v1696
    %1760 = vmatpush1.bf16.msra.mxu0 %v1695
    %1761 = vmatprep.subr.bf16.mxu0 %v1698
    %1762 = vmatpush1.bf16.msra.mxu0 %v1697
    %1763 = vmatprep.subr.bf16.mxu0 %v1700
    %1764 = vmatpush1.bf16.msra.mxu0 %v1699
    %1765 = vmatprep.subr.bf16.mxu0 %v1702
    %1766 = vmatpush1.bf16.msra.mxu0 %v1701
    %1767 = vmatprep.subr.bf16.mxu0 %v1704
    %1768 = vmatpush1.bf16.msra.mxu0 %v1703
    %1769 = vmatprep.subr.bf16.mxu0 %v1706
    %1770 = vmatpush1.bf16.msra.mxu0 %v1705
    %1771 = vmatprep.subr.bf16.mxu0 %v1708
    %1772 = vmatpush1.bf16.msra.mxu0 %v1707
    %1773 = vmatprep.subr.bf16.mxu0 %v1710
    %1774 = vmatpush1.bf16.msra.mxu0 %v1709
    %1775 = vmatprep.subr.bf16.mxu0 %v1712
    %1776 = vmatpush1.bf16.msra.mxu0 %v1711
    %1777 = vmatprep.subr.bf16.mxu0 %v1714
    %1778 = vmatpush1.bf16.msra.mxu0 %v1713
    %1779 = vmatprep.mubr.bf16.mxu0 %v1542
    %1780 = vmatmul.mubr.bf16.gmra.mrb[0].mxu0 %v1541
    %v1781 = vpop.f32.mrb[0].mxu0
    %v1782 = vadd.f32 %v1580, %v1781
    %v1783 = vpop.f32.mrb[0].mxu0
    %v1784 = vadd.f32 %v1584, %v1783
    %v1785 = vpop.f32.mrb[0].mxu0
    %v1786 = vpop.f32.mrb[0].mxu0
    %1787 = vdwg.mxu0
    %vm1788 = vcmp.gt.f32.partialorder %v1782, 0.0
    %vm1789 = vcmp.gt.f32.partialorder %v1784, 0.0
    %v1790 = vmul.f32 %v1782, 1.442695
    %v1791 = vpow.pop %v1790
    %v1792 = vmul.f32 %v1784, 1.442695
    %v1793 = vpow.pop %v1792
    %v1794 = vsub.f32 %v1791, 1.0
    %v1795 = vsub.f32 %v1793, 1.0
    %v1796 = vsel %vm1788, %v1782, %v1794
    %v1797 = vsel %vm1789, %v1784, %v1795
    %v1798 = vpack.c.bf16 %v1539, %v1539
    %v1799 = vpack.c.bf16 %v1540, %v1540
    %v1800 = vld [vmem:[#allocation13] sm:$0xff]
    %v1801 = vld [vmem:[#allocation13 + $0x8] sm:$0xff]
    %v1802 = vld [vmem:[#allocation13 + $0x10] sm:$0xff]
    %v1803 = vld [vmem:[#allocation13 + $0x18] sm:$0xff]
    %v1804 = vld [vmem:[#allocation13 + $0x20] sm:$0xff]
    %v1805 = vld [vmem:[#allocation13 + $0x28] sm:$0xff]
    %v1806 = vld [vmem:[#allocation13 + $0x30] sm:$0xff]
    %v1807 = vld [vmem:[#allocation13 + $0x38] sm:$0xff]
    %v1808 = vld [vmem:[#allocation13 + $0x40] sm:$0xff]
    %v1809 = vld [vmem:[#allocation13 + $0x48] sm:$0xff]
    %v1810 = vld [vmem:[#allocation13 + $0x50] sm:$0xff]
    %v1811 = vld [vmem:[#allocation13 + $0x58] sm:$0xff]
    %v1812 = vld [vmem:[#allocation13 + $0x60] sm:$0xff]
    %v1813 = vld [vmem:[#allocation13 + $0x68] sm:$0xff]
    %v1814 = vld [vmem:[#allocation13 + $0x70] sm:$0xff]
    %v1815 = vld [vmem:[#allocation13 + $0x78] sm:$0xff]
    %v1816 = vld [vmem:[#allocation13 + $0x80] sm:$0xff]
    %v1817 = vld [vmem:[#allocation13 + $0x88] sm:$0xff]
    %v1818 = vld [vmem:[#allocation13 + $0x90] sm:$0xff]
    %v1819 = vld [vmem:[#allocation13 + $0x98] sm:$0xff]
    %v1820 = vld [vmem:[#allocation13 + $0xa0] sm:$0xff]
    %v1821 = vld [vmem:[#allocation13 + $0xa8] sm:$0xff]
    %v1822 = vld [vmem:[#allocation13 + $0xb0] sm:$0xff]
    %v1823 = vld [vmem:[#allocation13 + $0xb8] sm:$0xff]
    %v1824 = vld [vmem:[#allocation13 + $0xc0] sm:$0xff]
    %v1825 = vld [vmem:[#allocation13 + $0xc8] sm:$0xff]
    %v1826 = vld [vmem:[#allocation13 + $0xd0] sm:$0xff]
    %v1827 = vld [vmem:[#allocation13 + $0xd8] sm:$0xff]
    %v1828 = vld [vmem:[#allocation13 + $0xe0] sm:$0xff]
    %v1829 = vld [vmem:[#allocation13 + $0xe8] sm:$0xff]
    %v1830 = vld [vmem:[#allocation13 + $0xf0] sm:$0xff]
    %v1831 = vld [vmem:[#allocation13 + $0xf8] sm:$0xff]
    %v1832 = vpack.c.bf16 %v1796, %v1796
    %v1833 = vpack.c.bf16 %v1797, %v1797
    %v1834 = vld [vmem:[#allocation14] sm:$0xff]
    %v1835 = vld [vmem:[#allocation14 + $0x8] sm:$0xff]
    %v1836 = vld [vmem:[#allocation14 + $0x10] sm:$0xff]
    %v1837 = vld [vmem:[#allocation14 + $0x18] sm:$0xff]
    %v1838 = vld [vmem:[#allocation14 + $0x20] sm:$0xff]
    %v1839 = vld [vmem:[#allocation14 + $0x28] sm:$0xff]
    %v1840 = vld [vmem:[#allocation14 + $0x30] sm:$0xff]
    %v1841 = vld [vmem:[#allocation14 + $0x38] sm:$0xff]
    %v1842 = vld [vmem:[#allocation14 + $0x40] sm:$0xff]
    %v1843 = vld [vmem:[#allocation14 + $0x48] sm:$0xff]
    %v1844 = vld [vmem:[#allocation14 + $0x50] sm:$0xff]
    %v1845 = vld [vmem:[#allocation14 + $0x58] sm:$0xff]
    %v1846 = vld [vmem:[#allocation14 + $0x60] sm:$0xff]
    %v1847 = vld [vmem:[#allocation14 + $0x68] sm:$0xff]
    %v1848 = vld [vmem:[#allocation14 + $0x70] sm:$0xff]
    %v1849 = vld [vmem:[#allocation14 + $0x78] sm:$0xff]
    %v1850 = vld [vmem:[#allocation14 + $0x80] sm:$0xff]
    %v1851 = vld [vmem:[#allocation14 + $0x88] sm:$0xff]
    %v1852 = vld [vmem:[#allocation14 + $0x90] sm:$0xff]
    %v1853 = vld [vmem:[#allocation14 + $0x98] sm:$0xff]
    %v1854 = vld [vmem:[#allocation14 + $0xa0] sm:$0xff]
    %v1855 = vld [vmem:[#allocation14 + $0xa8] sm:$0xff]
    %v1856 = vld [vmem:[#allocation14 + $0xb0] sm:$0xff]
    %v1857 = vld [vmem:[#allocation14 + $0xb8] sm:$0xff]
    %v1858 = vld [vmem:[#allocation14 + $0xc0] sm:$0xff]
    %v1859 = vld [vmem:[#allocation14 + $0xc8] sm:$0xff]
    %v1860 = vld [vmem:[#allocation14 + $0xd0] sm:$0xff]
    %v1861 = vld [vmem:[#allocation14 + $0xd8] sm:$0xff]
    %v1862 = vld [vmem:[#allocation14 + $0xe0] sm:$0xff]
    %v1863 = vld [vmem:[#allocation14 + $0xe8] sm:$0xff]
    %v1864 = vld [vmem:[#allocation14 + $0xf0] sm:$0xff]
    %v1865 = vld [vmem:[#allocation14 + $0xf8] sm:$0xff]
    %v1898 = vunpack.c.l.b16 %v1834
    %v1899 = vunpack.c.h.b16 %v1834
    %v1900 = vunpack.c.l.b16 %v1835
    %v1901 = vunpack.c.h.b16 %v1835
    %v1902 = vunpack.c.l.b16 %v1836
    %v1903 = vunpack.c.h.b16 %v1836
    %v1904 = vunpack.c.l.b16 %v1837
    %v1905 = vunpack.c.h.b16 %v1837
    %v1906 = vunpack.c.l.b16 %v1838
    %v1907 = vunpack.c.h.b16 %v1838
    %v1908 = vunpack.c.l.b16 %v1839
    %v1909 = vunpack.c.h.b16 %v1839
    %v1910 = vunpack.c.l.b16 %v1840
    %v1911 = vunpack.c.h.b16 %v1840
    %v1912 = vunpack.c.l.b16 %v1841
    %v1913 = vunpack.c.h.b16 %v1841
    %v1914 = vunpack.c.l.b16 %v1842
    %v1915 = vunpack.c.h.b16 %v1842
    %v1916 = vunpack.c.l.b16 %v1843
    %v1917 = vunpack.c.h.b16 %v1843
    %v1918 = vunpack.c.l.b16 %v1844
    %v1919 = vunpack.c.h.b16 %v1844
    %v1920 = vunpack.c.l.b16 %v1845
    %v1921 = vunpack.c.h.b16 %v1845
    %v1922 = vunpack.c.l.b16 %v1846
    %v1923 = vunpack.c.h.b16 %v1846
    %v1924 = vunpack.c.l.b16 %v1847
    %v1925 = vunpack.c.h.b16 %v1847
    %v1926 = vunpack.c.l.b16 %v1848
    %v1927 = vunpack.c.h.b16 %v1848
    %v1928 = vunpack.c.l.b16 %v1849
    %v1929 = vunpack.c.h.b16 %v1849
    %v1930 = vunpack.c.l.b16 %v1850
    %v1931 = vunpack.c.h.b16 %v1850
    %v1932 = vunpack.c.l.b16 %v1851
    %v1933 = vunpack.c.h.b16 %v1851
    %v1934 = vunpack.c.l.b16 %v1852
    %v1935 = vunpack.c.h.b16 %v1852
    %v1936 = vunpack.c.l.b16 %v1853
    %v1937 = vunpack.c.h.b16 %v1853
    %v1938 = vunpack.c.l.b16 %v1854
    %v1939 = vunpack.c.h.b16 %v1854
    %v1940 = vunpack.c.l.b16 %v1855
    %v1941 = vunpack.c.h.b16 %v1855
    %v1942 = vunpack.c.l.b16 %v1856
    %v1943 = vunpack.c.h.b16 %v1856
    %v1944 = vunpack.c.l.b16 %v1857
    %v1945 = vunpack.c.h.b16 %v1857
    %v1946 = vunpack.c.l.b16 %v1858
    %v1947 = vunpack.c.h.b16 %v1858
    %v1948 = vunpack.c.l.b16 %v1859
    %v1949 = vunpack.c.h.b16 %v1859
    %v1950 = vunpack.c.l.b16 %v1860
    %v1951 = vunpack.c.h.b16 %v1860
    %v1952 = vunpack.c.l.b16 %v1861
    %v1953 = vunpack.c.h.b16 %v1861
    %v1954 = vunpack.c.l.b16 %v1862
    %v1955 = vunpack.c.h.b16 %v1862
    %v1956 = vunpack.c.l.b16 %v1863
    %v1957 = vunpack.c.h.b16 %v1863
    %v1958 = vunpack.c.l.b16 %v1864
    %v1959 = vunpack.c.h.b16 %v1864
    %v1960 = vunpack.c.l.b16 %v1865
    %v1961 = vunpack.c.h.b16 %v1865
    %v1962 = vpack.c.b16 %v1900, %v1898
    %v1963 = vpack.c.b16 %v1901, %v1899
    %v1964 = vpack.c.b16 %v1904, %v1902
    %v1965 = vpack.c.b16 %v1905, %v1903
    %v1966 = vpack.c.b16 %v1908, %v1906
    %v1967 = vpack.c.b16 %v1909, %v1907
    %v1968 = vpack.c.b16 %v1912, %v1910
    %v1969 = vpack.c.b16 %v1913, %v1911
    %v1970 = vpack.c.b16 %v1916, %v1914
    %v1971 = vpack.c.b16 %v1917, %v1915
    %v1972 = vpack.c.b16 %v1920, %v1918
    %v1973 = vpack.c.b16 %v1921, %v1919
    %v1974 = vpack.c.b16 %v1924, %v1922
    %v1975 = vpack.c.b16 %v1925, %v1923
    %v1976 = vpack.c.b16 %v1928, %v1926
    %v1977 = vpack.c.b16 %v1929, %v1927
    %v1978 = vpack.c.b16 %v1932, %v1930
    %v1979 = vpack.c.b16 %v1933, %v1931
    %v1980 = vpack.c.b16 %v1936, %v1934
    %v1981 = vpack.c.b16 %v1937, %v1935
    %v1982 = vpack.c.b16 %v1940, %v1938
    %v1983 = vpack.c.b16 %v1941, %v1939
    %v1984 = vpack.c.b16 %v1944, %v1942
    %v1985 = vpack.c.b16 %v1945, %v1943
    %v1986 = vpack.c.b16 %v1948, %v1946
    %v1987 = vpack.c.b16 %v1949, %v1947
    %v1988 = vpack.c.b16 %v1952, %v1950
    %v1989 = vpack.c.b16 %v1953, %v1951
    %v1990 = vpack.c.b16 %v1956, %v1954
    %v1991 = vpack.c.b16 %v1957, %v1955
    %v1992 = vpack.c.b16 %v1960, %v1958
    %v1993 = vpack.c.b16 %v1961, %v1959
    %2026 = vmatprep.subr.bf16.mxu0 %v1963
    %2027 = vmatpush1.bf16.msra.mxu0 %v1962
    %2028 = vmatprep.subr.bf16.mxu0 %v1965
    %2029 = vmatpush1.bf16.msra.mxu0 %v1964
    %2030 = vmatprep.subr.bf16.mxu0 %v1967
    %2031 = vmatpush1.bf16.msra.mxu0 %v1966
    %2032 = vmatprep.subr.bf16.mxu0 %v1969
    %2033 = vmatpush1.bf16.msra.mxu0 %v1968
    %2034 = vmatprep.subr.bf16.mxu0 %v1971
    %2035 = vmatpush1.bf16.msra.mxu0 %v1970
    %2036 = vmatprep.subr.bf16.mxu0 %v1973
    %2037 = vmatpush1.bf16.msra.mxu0 %v1972
    %2038 = vmatprep.subr.bf16.mxu0 %v1975
    %2039 = vmatpush1.bf16.msra.mxu0 %v1974
    %2040 = vmatprep.subr.bf16.mxu0 %v1977
    %2041 = vmatpush1.bf16.msra.mxu0 %v1976
    %2042 = vmatprep.subr.bf16.mxu0 %v1979
    %2043 = vmatpush1.bf16.msra.mxu0 %v1978
    %2044 = vmatprep.subr.bf16.mxu0 %v1981
    %2045 = vmatpush1.bf16.msra.mxu0 %v1980
    %2046 = vmatprep.subr.bf16.mxu0 %v1983
    %2047 = vmatpush1.bf16.msra.mxu0 %v1982
    %2048 = vmatprep.subr.bf16.mxu0 %v1985
    %2049 = vmatpush1.bf16.msra.mxu0 %v1984
    %2050 = vmatprep.subr.bf16.mxu0 %v1987
    %2051 = vmatpush1.bf16.msra.mxu0 %v1986
    %2052 = vmatprep.subr.bf16.mxu0 %v1989
    %2053 = vmatpush1.bf16.msra.mxu0 %v1988
    %2054 = vmatprep.subr.bf16.mxu0 %v1991
    %2055 = vmatpush1.bf16.msra.mxu0 %v1990
    %2056 = vmatprep.subr.bf16.mxu0 %v1993
    %2057 = vmatpush1.bf16.msra.mxu0 %v1992
    %2058 = vmatprep.mubr.bf16.mxu0 %v1833
    %2059 = vmatmul.mubr.bf16.gmra.mrb[0].mxu0 %v1832
    %v2060 = vpop.f32.mrb[0].mxu0
    %v2061 = vadd.f32 0.0, %v2060
    %v2062 = vpop.f32.mrb[0].mxu0
    %v2063 = vadd.f32 0.0, %v2062
    %v2064 = vpop.f32.mrb[0].mxu0
    %v2065 = vpop.f32.mrb[0].mxu0
    %2066 = vdwg.mxu0
    %v2099 = vunpack.c.l.b16 %v1800
    %v2100 = vunpack.c.h.b16 %v1800
    %v2101 = vunpack.c.l.b16 %v1801
    %v2102 = vunpack.c.h.b16 %v1801
    %v2103 = vunpack.c.l.b16 %v1802
    %v2104 = vunpack.c.h.b16 %v1802
    %v2105 = vunpack.c.l.b16 %v1803
    %v2106 = vunpack.c.h.b16 %v1803
    %v2107 = vunpack.c.l.b16 %v1804
    %v2108 = vunpack.c.h.b16 %v1804
    %v2109 = vunpack.c.l.b16 %v1805
    %v2110 = vunpack.c.h.b16 %v1805
    %v2111 = vunpack.c.l.b16 %v1806
    %v2112 = vunpack.c.h.b16 %v1806
    %v2113 = vunpack.c.l.b16 %v1807
    %v2114 = vunpack.c.h.b16 %v1807
    %v2115 = vunpack.c.l.b16 %v1808
    %v2116 = vunpack.c.h.b16 %v1808
    %v2117 = vunpack.c.l.b16 %v1809
    %v2118 = vunpack.c.h.b16 %v1809
    %v2119 = vunpack.c.l.b16 %v1810
    %v2120 = vunpack.c.h.b16 %v1810
    %v2121 = vunpack.c.l.b16 %v1811
    %v2122 = vunpack.c.h.b16 %v1811
    %v2123 = vunpack.c.l.b16 %v1812
    %v2124 = vunpack.c.h.b16 %v1812
    %v2125 = vunpack.c.l.b16 %v1813
    %v2126 = vunpack.c.h.b16 %v1813
    %v2127 = vunpack.c.l.b16 %v1814
    %v2128 = vunpack.c.h.b16 %v1814
    %v2129 = vunpack.c.l.b16 %v1815
    %v2130 = vunpack.c.h.b16 %v1815
    %v2131 = vunpack.c.l.b16 %v1816
    %v2132 = vunpack.c.h.b16 %v1816
    %v2133 = vunpack.c.l.b16 %v1817
    %v2134 = vunpack.c.h.b16 %v1817
    %v2135 = vunpack.c.l.b16 %v1818
    %v2136 = vunpack.c.h.b16 %v1818
    %v2137 = vunpack.c.l.b16 %v1819
    %v2138 = vunpack.c.h.b16 %v1819
    %v2139 = vunpack.c.l.b16 %v1820
    %v2140 = vunpack.c.h.b16 %v1820
    %v2141 = vunpack.c.l.b16 %v1821
    %v2142 = vunpack.c.h.b16 %v1821
    %v2143 = vunpack.c.l.b16 %v1822
    %v2144 = vunpack.c.h.b16 %v1822
    %v2145 = vunpack.c.l.b16 %v1823
    %v2146 = vunpack.c.h.b16 %v1823
    %v2147 = vunpack.c.l.b16 %v1824
    %v2148 = vunpack.c.h.b16 %v1824
    %v2149 = vunpack.c.l.b16 %v1825
    %v2150 = vunpack.c.h.b16 %v1825
    %v2151 = vunpack.c.l.b16 %v1826
    %v2152 = vunpack.c.h.b16 %v1826
    %v2153 = vunpack.c.l.b16 %v1827
    %v2154 = vunpack.c.h.b16 %v1827
    %v2155 = vunpack.c.l.b16 %v1828
    %v2156 = vunpack.c.h.b16 %v1828
    %v2157 = vunpack.c.l.b16 %v1829
    %v2158 = vunpack.c.h.b16 %v1829
    %v2159 = vunpack.c.l.b16 %v1830
    %v2160 = vunpack.c.h.b16 %v1830
    %v2161 = vunpack.c.l.b16 %v1831
    %v2162 = vunpack.c.h.b16 %v1831
    %v2163 = vpack.c.b16 %v2101, %v2099
    %v2164 = vpack.c.b16 %v2102, %v2100
    %v2165 = vpack.c.b16 %v2105, %v2103
    %v2166 = vpack.c.b16 %v2106, %v2104
    %v2167 = vpack.c.b16 %v2109, %v2107
    %v2168 = vpack.c.b16 %v2110, %v2108
    %v2169 = vpack.c.b16 %v2113, %v2111
    %v2170 = vpack.c.b16 %v2114, %v2112
    %v2171 = vpack.c.b16 %v2117, %v2115
    %v2172 = vpack.c.b16 %v2118, %v2116
    %v2173 = vpack.c.b16 %v2121, %v2119
    %v2174 = vpack.c.b16 %v2122, %v2120
    %v2175 = vpack.c.b16 %v2125, %v2123
    %v2176 = vpack.c.b16 %v2126, %v2124
    %v2177 = vpack.c.b16 %v2129, %v2127
    %v2178 = vpack.c.b16 %v2130, %v2128
    %v2179 = vpack.c.b16 %v2133, %v2131
    %v2180 = vpack.c.b16 %v2134, %v2132
    %v2181 = vpack.c.b16 %v2137, %v2135
    %v2182 = vpack.c.b16 %v2138, %v2136
    %v2183 = vpack.c.b16 %v2141, %v2139
    %v2184 = vpack.c.b16 %v2142, %v2140
    %v2185 = vpack.c.b16 %v2145, %v2143
    %v2186 = vpack.c.b16 %v2146, %v2144
    %v2187 = vpack.c.b16 %v2149, %v2147
    %v2188 = vpack.c.b16 %v2150, %v2148
    %v2189 = vpack.c.b16 %v2153, %v2151
    %v2190 = vpack.c.b16 %v2154, %v2152
    %v2191 = vpack.c.b16 %v2157, %v2155
    %v2192 = vpack.c.b16 %v2158, %v2156
    %v2193 = vpack.c.b16 %v2161, %v2159
    %v2194 = vpack.c.b16 %v2162, %v2160
    %2227 = vmatprep.subr.bf16.mxu0 %v2164
    %2228 = vmatpush1.bf16.msra.mxu0 %v2163
    %2229 = vmatprep.subr.bf16.mxu0 %v2166
    %2230 = vmatpush1.bf16.msra.mxu0 %v2165
    %2231 = vmatprep.subr.bf16.mxu0 %v2168
    %2232 = vmatpush1.bf16.msra.mxu0 %v2167
    %2233 = vmatprep.subr.bf16.mxu0 %v2170
    %2234 = vmatpush1.bf16.msra.mxu0 %v2169
    %2235 = vmatprep.subr.bf16.mxu0 %v2172
    %2236 = vmatpush1.bf16.msra.mxu0 %v2171
    %2237 = vmatprep.subr.bf16.mxu0 %v2174
    %2238 = vmatpush1.bf16.msra.mxu0 %v2173
    %2239 = vmatprep.subr.bf16.mxu0 %v2176
    %2240 = vmatpush1.bf16.msra.mxu0 %v2175
    %2241 = vmatprep.subr.bf16.mxu0 %v2178
    %2242 = vmatpush1.bf16.msra.mxu0 %v2177
    %2243 = vmatprep.subr.bf16.mxu0 %v2180
    %2244 = vmatpush1.bf16.msra.mxu0 %v2179
    %2245 = vmatprep.subr.bf16.mxu0 %v2182
    %2246 = vmatpush1.bf16.msra.mxu0 %v2181
    %2247 = vmatprep.subr.bf16.mxu0 %v2184
    %2248 = vmatpush1.bf16.msra.mxu0 %v2183
    %2249 = vmatprep.subr.bf16.mxu0 %v2186
    %2250 = vmatpush1.bf16.msra.mxu0 %v2185
    %2251 = vmatprep.subr.bf16.mxu0 %v2188
    %2252 = vmatpush1.bf16.msra.mxu0 %v2187
    %2253 = vmatprep.subr.bf16.mxu0 %v2190
    %2254 = vmatpush1.bf16.msra.mxu0 %v2189
    %2255 = vmatprep.subr.bf16.mxu0 %v2192
    %2256 = vmatpush1.bf16.msra.mxu0 %v2191
    %2257 = vmatprep.subr.bf16.mxu0 %v2194
    %2258 = vmatpush1.bf16.msra.mxu0 %v2193
    %2259 = vmatprep.mubr.bf16.mxu0 %v1799
    %2260 = vmatmul.mubr.bf16.gmra.mrb[0].mxu0 %v1798
    %v2261 = vpop.f32.mrb[0].mxu0
    %v2262 = vadd.f32 %v2061, %v2261
    %v2263 = vpop.f32.mrb[0].mxu0
    %v2264 = vadd.f32 %v2063, %v2263
    %v2265 = vpop.f32.mrb[0].mxu0
    %v2266 = vpop.f32.mrb[0].mxu0
    %2267 = vdwg.mxu0
    %v2268 = vld [vmem:[%s16] sm:$0x3]
    %v2270 = vlaneseq
    %v2271 = vshrl.u32 %v2270, 7
    %v2272 = vsub.s32 0, %v2271
    %v2273 = vrot.slane %v2268, %v2272
    %v2274 = vlaneseq
    %v2275 = vshrl.u32 %v2274, 7
    %v2276 = vsub.s32 1, %v2275
    %v2277 = vrot.slane %v2268, %v2276
    %v2280 = vadd.f32 %v2262, %v2273
    %v2281 = vadd.f32 %v2264, %v2277
    %v2282 = vld [vmem:[%s1] sm:$0xff]
    %2284 = vrot.lane.b32.xlu0 %v2281, 1
    %v2285 = vpop.permute.xlu0 %2284
    %v2287 = vmul.f32 %v2282, %v2285
    %v2288 = vsub.f32 1.0, %v2282
    %2289 = vrot.lane.b32.xlu0 %v2281, 2
    %v2290 = vpop.permute.xlu0 %2289
    %v2292 = vmul.f32 %v2288, %v2290
    %v2293 = vadd.f32 %v2287, %v2292
    %v2294 = vadd.f32 %v772, %v2280
    %v2295 = vadd.f32 %v773, %v2281
    %v2296 = vlaneseq
    %v2297 = vand.u32 %v2296, 127
    %v2298 = vadd.s32 %v2297, 128
    %vm2299 = vcmp.eq.s32.totalorder %v2297, 253
    %vm2300 = vcmp.eq.s32.totalorder %v2298, 253
    %2302 = vset.pattern.permute.xlu0 0
    %2303 = vperm.xlu0 %2302, %v2293
    %v2304 = vpop.permute.xlu0 %2303
    %v2306 = vsel %vm2299, %v2304, %v2294
    %v2307 = vsel %vm2300, %v2304, %v2295
    %2308 = vst [vmem:[#allocation16] sm:$0xff] %v2306
    %2309 = vst [vmem:[#allocation16 + $0x8] sm:$0xff] %v2307
    // Predicated region
    $region102: #{tpu_custom_call.1} parent=1 // pred_check
      _
    $region103: #{tpu_custom_call.1} parent=1 // pred_check_branch
      %2311 = sbr.rel (0) target = $region105
    $region104: #{tpu_custom_call.1} parent=1 // pred_region
      %s2313 = ssub.s32 256, 256
      %2314 = vsyncadd [#allocation4], %s2313
      %s2316 = sshll.u32 [#allocation16], 4
      %s2317 = int_to_ptr.vmem [resolvable:$true] %s2316
      %2319 = dma.vmem_to_hbm [thread:$0]  %s2317, 256, %s17, [#allocation4]
    $region105: #{tpu_custom_call.1} parent=1 // pred_fallthru
      _
    // Predicated region
    $region106: #{tpu_custom_call.1} parent=1 // pred_check
      _
    $region107: #{tpu_custom_call.1} parent=1 // pred_check_branch
      %2321 = sbr.rel (0) target = $region109
    $region108: #{tpu_custom_call.1} parent=1 // pred_region
      %2322 = dma.done [#allocation4], 256
    $region109: #{tpu_custom_call.1} parent=1 // pred_fallthru
      _
    %2323 = vsyncpa [#allocation3], 1
    %2324 = vsyncpa [#allocation6], 1
    %2325 = vsyncpa [#allocation9], 1
    %2326 = vsyncpa [#allocation12], 1
    %2327 = vsyncpa [#allocation15], 1
    %2328 = vsyncpa [#allocation4], 1

</llo_original>
